<compile_context>
chip_gen: v7x
topology: tpu7x:2x2x1
jax: 0.10.0
libtpu: 0.0.40
codegen_flags: <defaults>
</compile_context>

<pallas_src>
import functools

import jax
import jax.numpy as jnp
from jax.experimental import pallas as pl
from jax.experimental.pallas import tpu as pltpu


# ----------------------------------------------------------------------------
# Kernel
# ----------------------------------------------------------------------------
def _quick_gelu(v, approx):
    # QuickGELU: v * sigmoid(1.702 * v).
    if approx:
        # exp on EUP + approximate reciprocal (separate EUP op) instead of the
        # full sigmoid lowering — halves EUP work per element.
        return v * pl.reciprocal(1.0 + jnp.exp(-1.702 * v), approx=True)
    return v * jax.nn.sigmoid(1.702 * v)


def adapter_kernel(x_ref, wd_ref, bd_ref, g_ref, beta_ref, wu_ref, bu_ref, o_ref,
                   *, approx_gelu: bool):
    # Hoist 1-D params once, in f32 (JAX does not CSE broadcast_in_dim).
    b_down = bd_ref[...].astype(jnp.float32)     # [1, H]
    gamma = g_ref[...].astype(jnp.float32)       # [1, H]
    beta = beta_ref[...].astype(jnp.float32)     # [1, H]
    b_up = bu_ref[...].astype(jnp.float32)       # [1, D]

    x = x_ref[...]                               # [TM, D], storage dtype

    # down_mlp: matmul in the weights' storage dtype (bf16 MXU fast path when
    # the weights are bf16), f32 MXU accumulation.  Only the [TM, D]
    # activation tile is cast, never the weight matrix.
    h = jnp.dot(x.astype(wd_ref.dtype), wd_ref[...],
                preferred_element_type=jnp.float32) + b_down          # [TM, H]
    h = _quick_gelu(h, approx_gelu)

    # LayerNorm over features, f32 (matches the fp32-upcasting LayerNorm).
    # One-pass statistics: E[h] and E[h^2] over the same live h (saves a full
    # [TM,H] traversal + one XLU reduction and the (h-mean) temporary).
    mean = jnp.mean(h, axis=-1, keepdims=True)
    mean_sq = jnp.mean(h * h, axis=-1, keepdims=True)
    var = jnp.maximum(mean_sq - mean * mean, 0.0)
    h = (h - mean) * jax.lax.rsqrt(var + 1e-5)
    h = h * gamma + beta

    # up_mlp
    y = jnp.dot(h.astype(wu_ref.dtype), wu_ref[...],
                preferred_element_type=jnp.float32) + b_up            # [TM, D]
    y = _quick_gelu(y, approx_gelu)

    # residual (f32) then cast back to the activation storage dtype.
    o_ref[...] = (y + x.astype(jnp.float32)).astype(o_ref.dtype)


# ----------------------------------------------------------------------------
# Sizing helpers (trace-time Python)
# ----------------------------------------------------------------------------
def _vmem_capacity_bytes():
    try:
        return int(pltpu.get_tpu_info().vmem_capacity_bytes)
    except Exception:
        return 64 << 20        # conservative default (safe on every generation)


def _round_up(a, m):
    return ((a + m - 1) // m) * m


def _weight_bytes(D, H, w_itemsize, weight_bufs):
    # Both weight matrices + the four 1-D params, per resident buffer count.
    return weight_bufs * (2 * D * H * w_itemsize + (3 * H + D) * 4)


def _per_row_bytes(D, H, x_itemsize, out_itemsize, w_itemsize):
    # Double-buffered in/out row tiles + ~3 live f32 [*,H] temporaries + the
    # bf16 cast copies feeding both matmuls + one f32 [*,D] temporary.
    return (2 * D * (x_itemsize + out_itemsize)
            + H * (3 * 4 + w_itemsize)
            + D * (2 * 4 + w_itemsize))


def _derive_tile_m(D, H, x_itemsize, out_itemsize, w_itemsize, weight_bufs, granule):
    cap = int(_vmem_capacity_bytes() * 0.80)
    avail = cap - _weight_bytes(D, H, w_itemsize, weight_bufs) - (8 << 20)
    per_row = max(_per_row_bytes(D, H, x_itemsize, out_itemsize, w_itemsize), 1)
    if avail <= granule * per_row:
        return 256
    tm = int(avail // per_row)
    return max(granule, min(1024, (tm // granule) * granule))


def _vmem_limit_bytes(tm, D, H, x_itemsize, out_itemsize, w_itemsize, weight_bufs):
    est = (2 * tm * D * (x_itemsize + out_itemsize)
           + _weight_bytes(D, H, w_itemsize, weight_bufs)
           + tm * H * (3 * 4 + w_itemsize)
           + tm * D * (2 * 4 + w_itemsize)
           + (6 << 20))                              # compiler-internal headroom
    cap = int(_vmem_capacity_bytes() * 0.80)         # ~102 MiB (v5e/v6e), ~51 MiB (v7x)
    return int(min(max(est, 32 << 20), cap))


def _choose_row_tile(n_rows, tile_m, granule):
    cdiv = lambda a, b: -(-a // b)
    tm = max(granule, (min(tile_m, n_rows) // granule) * granule)
    nb = cdiv(n_rows, tm)
    # v7x megacore: prefer an EVEN number of grid steps so both TensorCores
    # sharding the 'parallel' axis get balanced work (neutral on v5e/v6e).
    if nb % 2 == 1 and n_rows > granule:
        tm_even = max(granule, _round_up(cdiv(n_rows, nb + 1), granule))
        nb_even = cdiv(n_rows, tm_even)
        if nb_even % 2 == 0:
            tm, nb = tm_even, nb_even
    return tm, nb


def _const_spec(shape, single_buffer):
    # Resident (grid-invariant) block: single-buffer it so it does not occupy
    # 2x its size in VMEM.  Falls back to the default spec on builds without
    # pl.Buffered.
    if single_buffer and hasattr(pl, "Buffered"):
        return pl.BlockSpec(shape, lambda i: (0, 0), pipeline_mode=pl.Buffered(1))
    return pl.BlockSpec(shape, lambda i: (0, 0))


# ----------------------------------------------------------------------------
# Wrapper
# ----------------------------------------------------------------------------
def _adapter_apply(x, params, *, tile_m=None, approx_gelu=True,
                   single_buffer_weights=True):
    """x: [B, S, D]; params = (w_down[D,H], b_down[H], ln_g[H], ln_b[H],
    w_up[H,D], b_up[D]).

    Performance contract: w_down / w_up should be bf16 (cast once outside the
    kernel, e.g. via prepare_params_bf16); biases / LayerNorm params stay f32.
    The f32-weight path is a correctness fallback only (multi-pass MXU).
    """
    w_down, b_down, ln_g, ln_b, w_up, b_up = params
    B, S, D = x.shape
    H = w_down.shape[1]
    N = B * S
    x2 = x.reshape(N, D)

    x_item = jnp.dtype(x.dtype).itemsize
    w_item = max(jnp.dtype(w_down.dtype).itemsize, jnp.dtype(w_up.dtype).itemsize)
    # Row-tile granule: 8 rows for 32-bit activations, 16 for bf16 (packing).
    granule = 16 if x_item == 2 else 8
    weight_bufs = 1 if single_buffer_weights else 2

    if tile_m is None:
        tile_m = _derive_tile_m(D, H, x_item, x_item, w_item, weight_bufs, granule)

    tm, num_blocks = _choose_row_tile(N, tile_m, granule)

    # Pad rows to an exact multiple of the tile (padded rows are computed and
    # sliced off afterwards — harmless, var+eps avoids NaN).
    n_pad = num_blocks * tm
    if n_pad != N:
        x2 = jnp.pad(x2, ((0, n_pad - N), (0, 0)))

    # 1-D params as f32 [1, F] rows so they tile cleanly into VMEM.
    b_down2 = b_down.reshape(1, H).astype(jnp.float32)
    ln_g2 = ln_g.reshape(1, H).astype(jnp.float32)
    ln_b2 = ln_b.reshape(1, H).astype(jnp.float32)
    b_up2 = b_up.reshape(1, D).astype(jnp.float32)

    vmem_limit = _vmem_limit_bytes(tm, D, H, x_item, x_item, w_item, weight_bufs)

    kernel = functools.partial(adapter_kernel, approx_gelu=approx_gelu)

    out = pl.pallas_call(
        kernel,
        out_shape=jax.ShapeDtypeStruct((n_pad, D), x.dtype),
        grid=(num_blocks,),
        in_specs=[
            pl.BlockSpec((tm, D), lambda i: (i, 0)),          # x row tile
            _const_spec((D, H), single_buffer_weights),        # W_down (resident)
            _const_spec((1, H), single_buffer_weights),        # b_down
            _const_spec((1, H), single_buffer_weights),        # ln gamma
            _const_spec((1, H), single_buffer_weights),        # ln beta
            _const_spec((H, D), single_buffer_weights),        # W_up (resident)
            _const_spec((1, D), single_buffer_weights),        # b_up
        ],
        out_specs=pl.BlockSpec((tm, D), lambda i: (i, 0)),
        compiler_params=pltpu.CompilerParams(
            dimension_semantics=("parallel",),
            vmem_limit_bytes=vmem_limit),
    )(x2, w_down, b_down2, ln_g2, ln_b2, w_up, b_up2)

    return out[:N].reshape(B, S, D)


adapter_apply = jax.jit(
    _adapter_apply,
    static_argnames=("tile_m", "approx_gelu", "single_buffer_weights"))


def adapter_forward(x, params, *, tile_m=None, approx_gelu=True):
    """Preferred entry point: single-buffered resident weights; retraces with
    default double-buffering if this JAX build rejects pl.Buffered(1)."""
    try:
        return adapter_apply(x, params, tile_m=tile_m, approx_gelu=approx_gelu,
                             single_buffer_weights=True)
    except Exception:
        return adapter_apply(x, params, tile_m=tile_m, approx_gelu=approx_gelu,
                             single_buffer_weights=False)


def prepare_params_bf16(params):
    """Cast the two weight matrices to bf16 once (performance path); keep
    biases / LayerNorm affine params in f32 (fp32 LayerNorm semantics)."""
    w_down, b_down, ln_g, ln_b, w_up, b_up = params
    return (w_down.astype(jnp.bfloat16), b_down, ln_g, ln_b,
            w_up.astype(jnp.bfloat16), b_up)


# ----------------------------------------------------------------------------
# Pure-JAX reference (mirrors the PyTorch module's dtype path)
# ----------------------------------------------------------------------------
def reference_adapter(x, params):
    w_down, b_down, ln_g, ln_b, w_up, b_up = params
    hp = jax.lax.Precision.HIGHEST
    xf = x.astype(jnp.float32)
    h = jnp.dot(x.astype(w_down.dtype), w_down,
                preferred_element_type=jnp.float32, precision=hp) \
        + b_down.astype(jnp.float32)
    h = h * jax.nn.sigmoid(1.702 * h)
    mean = jnp.mean(h, axis=-1, keepdims=True)
    var = jnp.mean(jnp.square(h - mean), axis=-1, keepdims=True)
    h = (h - mean) * jax.lax.rsqrt(var + 1e-5) * ln_g.astype(jnp.float32) \
        + ln_b.astype(jnp.float32)
    y = jnp.dot(h.astype(w_up.dtype), w_up,
                preferred_element_type=jnp.float32, precision=hp) \
        + b_up.astype(jnp.float32)
    y = y * jax.nn.sigmoid(1.702 * y)
    return (y + xf).astype(x.dtype)


# ----------------------------------------------------------------------------
# Self-contained test
# ----------------------------------------------------------------------------
if __name__ == "__main__":
    # Small but lane-dense shapes: D is a multiple of 128 so stores are
    # unmasked full-lane vst.
    B, S, D = 2, 8, 128
    H = 2 * D

    key = jax.random.PRNGKey(0)
    kx, kwd, kbd, kwu, kbu, kg, kb = jax.random.split(key, 7)

    x = jax.random.normal(kx, (B, S, D), dtype=jnp.float32)

    w_down = jax.random.normal(kwd, (D, H), dtype=jnp.float32) * (2.0 / D) ** 0.5
    b_down = jax.random.normal(kbd, (H,), dtype=jnp.float32) * 0.01
    ln_g = 1.0 + 0.1 * jax.random.normal(kg, (H,), dtype=jnp.float32)
    ln_b = 0.05 * jax.random.normal(kb, (H,), dtype=jnp.float32)
    w_up = jax.random.normal(kwu, (H, D), dtype=jnp.float32) * (2.0 / H) ** 0.5
    b_up = jax.random.normal(kbu, (D,), dtype=jnp.float32) * 0.01

    params_f32 = (w_down, b_down, ln_g, ln_b, w_up, b_up)

    # 1) Correctness fallback path: f32 weights, exact sigmoid.  Tolerance
    #    covers the in-kernel default MXU precision vs the HIGHEST-precision
    #    reference plus the one-pass LayerNorm statistics.
    out_f32 = jax.block_until_ready(adapter_forward(x, params_f32, approx_gelu=False))
    ref_f32 = reference_adapter(x, params_f32)
    assert out_f32.shape == (B, S, D)
    assert jnp.allclose(out_f32, ref_f32, atol=5e-4, rtol=5e-4), \
        "f32 mismatch vs reference"

    # 2) Performance path: bf16 weights (cast once outside the kernel),
    #    approx-reciprocal QuickGELU, f32 MXU accumulation + f32 LayerNorm.
    params_bf16 = prepare_params_bf16(params_f32)
    out_bf16 = jax.block_until_ready(adapter_forward(x, params_bf16, approx_gelu=True))
    ref_bf16 = reference_adapter(x, params_bf16)
    assert jnp.allclose(out_bf16.astype(jnp.float32), ref_bf16.astype(jnp.float32),
                        atol=2e-2, rtol=2e-2), "bf16-weight mismatch vs reference"

    # 3) bf16 activations in/out as well (HBM-bandwidth path, esp. v5e);
    #    residual still added in f32 inside the kernel.
    x_bf16 = x.astype(jnp.bfloat16)
    out_act = jax.block_until_ready(adapter_forward(x_bf16, params_bf16, approx_gelu=True))
    ref_act = reference_adapter(x_bf16, params_bf16)
    assert out_act.dtype == jnp.bfloat16
    assert jnp.allclose(out_act.astype(jnp.float32), ref_act.astype(jnp.float32),
                        atol=5e-2, rtol=5e-2), "bf16-activation mismatch vs reference"

    print("KERNEL_OK")
</pallas_src>

<mosaic_0001>
module attributes {stable_mosaic.version = 11 : i64} {
  func.func @adapter_kernel(%arg0: i32, %arg1: memref<8x128xf32, #tpu.memory_space<vmem>>, %arg2: memref<128x256xf32, #tpu.memory_space<vmem>>, %arg3: memref<1x256xf32, #tpu.memory_space<vmem>>, %arg4: memref<1x256xf32, #tpu.memory_space<vmem>>, %arg5: memref<1x256xf32, #tpu.memory_space<vmem>>, %arg6: memref<256x128xf32, #tpu.memory_space<vmem>>, %arg7: memref<1x128xf32, #tpu.memory_space<vmem>>, %arg8: memref<8x128xf32, #tpu.memory_space<vmem>>) attributes {dimension_semantics = [#tpu.dimension_semantics<parallel>], iteration_bounds = array<i64: 2>, scalar_prefetch = 0 : i64, scratch_operands = 0 : i64, tpu.core_type = #tpu.core_type<tc>, window_params = [{transform_indices = @transform_0, window_bounds = array<i64: 8, 128>}, {pipeline_mode = #tpu.pipeline_mode<synchronous>, transform_indices = @transform_1, window_bounds = array<i64: 128, 256>}, {pipeline_mode = #tpu.pipeline_mode<synchronous>, transform_indices = @transform_2, window_bounds = array<i64: 1, 256>}, {pipeline_mode = #tpu.pipeline_mode<synchronous>, transform_indices = @transform_3, window_bounds = array<i64: 1, 256>}, {pipeline_mode = #tpu.pipeline_mode<synchronous>, transform_indices = @transform_4, window_bounds = array<i64: 1, 256>}, {pipeline_mode = #tpu.pipeline_mode<synchronous>, transform_indices = @transform_5, window_bounds = array<i64: 256, 128>}, {pipeline_mode = #tpu.pipeline_mode<synchronous>, transform_indices = @transform_6, window_bounds = array<i64: 1, 128>}, {transform_indices = @transform_7, window_bounds = array<i64: 8, 128>}]} {
    %c0 = arith.constant 0 : index
    %c0_0 = arith.constant 0 : index
    %0 = vector.load %arg3[%c0, %c0_0] : memref<1x256xf32, #tpu.memory_space<vmem>>, vector<1x256xf32>
    %c0_1 = arith.constant 0 : index
    %c0_2 = arith.constant 0 : index
    %1 = vector.load %arg4[%c0_1, %c0_2] : memref<1x256xf32, #tpu.memory_space<vmem>>, vector<1x256xf32>
    %c0_3 = arith.constant 0 : index
    %c0_4 = arith.constant 0 : index
    %2 = vector.load %arg5[%c0_3, %c0_4] : memref<1x256xf32, #tpu.memory_space<vmem>>, vector<1x256xf32>
    %c0_5 = arith.constant 0 : index
    %c0_6 = arith.constant 0 : index
    %3 = vector.load %arg7[%c0_5, %c0_6] : memref<1x128xf32, #tpu.memory_space<vmem>>, vector<1x128xf32>
    %c0_7 = arith.constant 0 : index
    %c0_8 = arith.constant 0 : index
    %4 = vector.load %arg1[%c0_7, %c0_8] : memref<8x128xf32, #tpu.memory_space<vmem>>, vector<8x128xf32>
    %c0_9 = arith.constant 0 : index
    %c0_10 = arith.constant 0 : index
    %5 = vector.load %arg2[%c0_9, %c0_10] : memref<128x256xf32, #tpu.memory_space<vmem>>, vector<128x256xf32>
    %cst = arith.constant dense<0.000000e+00> : vector<8x256xf32>
    %6 = tpu.matmul %4, %5, %cst {dimension_numbers = #tpu.dot_dimension_numbers<[1], [0], [0], [1], [0, 0, 1, 1], [], []>} : vector<8x128xf32>, vector<128x256xf32>, vector<8x256xf32> -> vector<8x256xf32>
    %7 = vector.broadcast %0 : vector<1x256xf32> to vector<8x256xf32>
    %8 = arith.addf %6, %7 : vector<8x256xf32>
    %cst_11 = arith.constant 1.702000e+00 : f32
    %9 = vector.broadcast %cst_11 : f32 to vector<8x256xf32>
    %10 = arith.mulf %9, %8 : vector<8x256xf32>
    %11 = arith.negf %10 : vector<8x256xf32>
    %12 = math.exp %11 : vector<8x256xf32>
    %cst_12 = arith.constant 1.000000e+00 : f32
    %13 = vector.broadcast %cst_12 : f32 to vector<8x256xf32>
    %14 = arith.addf %13, %12 : vector<8x256xf32>
    %15 = arith.divf %13, %14 : vector<8x256xf32>
    %16 = arith.mulf %8, %15 : vector<8x256xf32>
    %cst_13 = arith.constant dense<0.000000e+00> : vector<8xf32>
    %17 = vector.multi_reduction <add>, %16, %cst_13 [1] : vector<8x256xf32> to vector<8xf32>
    %18 = vector.shape_cast %17 : vector<8xf32> to vector<8x1xf32>
    %cst_14 = arith.constant 2.560000e+02 : f32
    %19 = vector.broadcast %cst_14 : f32 to vector<8x1xf32>
    %20 = arith.divf %18, %19 : vector<8x1xf32>
    %21 = arith.mulf %16, %16 : vector<8x256xf32>
    %cst_15 = arith.constant dense<0.000000e+00> : vector<8xf32>
    %22 = vector.multi_reduction <add>, %21, %cst_15 [1] : vector<8x256xf32> to vector<8xf32>
    %23 = vector.shape_cast %22 : vector<8xf32> to vector<8x1xf32>
    %cst_16 = arith.constant 2.560000e+02 : f32
    %24 = vector.broadcast %cst_16 : f32 to vector<8x1xf32>
    %25 = arith.divf %23, %24 : vector<8x1xf32>
    %26 = arith.mulf %20, %20 : vector<8x1xf32>
    %27 = arith.subf %25, %26 : vector<8x1xf32>
    %cst_17 = arith.constant 0.000000e+00 : f32
    %28 = vector.broadcast %cst_17 : f32 to vector<8x1xf32>
    %29 = arith.maximumf %27, %28 : vector<8x1xf32>
    %30 = vector.broadcast %20 : vector<8x1xf32> to vector<8x256xf32>
    %31 = arith.subf %16, %30 : vector<8x256xf32>
    %cst_18 = arith.constant 9.99999974E-6 : f32
    %32 = vector.broadcast %cst_18 : f32 to vector<8x1xf32>
    %33 = arith.addf %29, %32 : vector<8x1xf32>
    %34 = math.rsqrt %33 : vector<8x1xf32>
    %35 = vector.broadcast %34 : vector<8x1xf32> to vector<8x256xf32>
    %36 = arith.mulf %31, %35 : vector<8x256xf32>
    %37 = vector.broadcast %1 : vector<1x256xf32> to vector<8x256xf32>
    %38 = arith.mulf %36, %37 : vector<8x256xf32>
    %39 = vector.broadcast %2 : vector<1x256xf32> to vector<8x256xf32>
    %40 = arith.addf %38, %39 : vector<8x256xf32>
    %c0_19 = arith.constant 0 : index
    %c0_20 = arith.constant 0 : index
    %41 = vector.load %arg6[%c0_19, %c0_20] : memref<256x128xf32, #tpu.memory_space<vmem>>, vector<256x128xf32>
    %cst_21 = arith.constant dense<0.000000e+00> : vector<8x128xf32>
    %42 = tpu.matmul %40, %41, %cst_21 {dimension_numbers = #tpu.dot_dimension_numbers<[1], [0], [0], [1], [0, 0, 1, 1], [], []>} : vector<8x256xf32>, vector<256x128xf32>, vector<8x128xf32> -> vector<8x128xf32>
    %43 = vector.broadcast %3 : vector<1x128xf32> to vector<8x128xf32>
    %44 = arith.addf %42, %43 : vector<8x128xf32>
    %cst_22 = arith.constant 1.702000e+00 : f32
    %45 = vector.broadcast %cst_22 : f32 to vector<8x128xf32>
    %46 = arith.mulf %45, %44 : vector<8x128xf32>
    %47 = arith.negf %46 : vector<8x128xf32>
    %48 = math.exp %47 : vector<8x128xf32>
    %cst_23 = arith.constant 1.000000e+00 : f32
    %49 = vector.broadcast %cst_23 : f32 to vector<8x128xf32>
    %50 = arith.addf %49, %48 : vector<8x128xf32>
    %51 = arith.divf %49, %50 : vector<8x128xf32>
    %52 = arith.mulf %44, %51 : vector<8x128xf32>
    %53 = arith.addf %52, %4 : vector<8x128xf32>
    %c0_24 = arith.constant 0 : index
    %c0_25 = arith.constant 0 : index
    %54 = vector.load %arg8[%c0_24, %c0_25] : memref<8x128xf32, #tpu.memory_space<vmem>>, vector<8x128xf32>
    tpu.vector_store %arg8[%c0_24, %c0_25], %53 {strides = array<i32>} : memref<8x128xf32, #tpu.memory_space<vmem>>, vector<8x128xf32>,
    return
  }
  func.func @transform_0(%arg0: i32) -> (i32, i32) {
    %c0_i32 = arith.constant 0 : i32
    %c0_i32_0 = arith.constant 0 : i32
    return %arg0, %c0_i32 : i32, i32
  }
  func.func @transform_1(%arg0: i32) -> (i32, i32) {
    %c0_i32 = arith.constant 0 : i32
    %c0_i32_0 = arith.constant 0 : i32
    %c0_i32_1 = arith.constant 0 : i32
    return %c0_i32, %c0_i32_0 : i32, i32
  }
  func.func @transform_2(%arg0: i32) -> (i32, i32) {
    %c0_i32 = arith.constant 0 : i32
    %c0_i32_0 = arith.constant 0 : i32
    %c0_i32_1 = arith.constant 0 : i32
    return %c0_i32, %c0_i32_0 : i32, i32
  }
  func.func @transform_3(%arg0: i32) -> (i32, i32) {
    %c0_i32 = arith.constant 0 : i32
    %c0_i32_0 = arith.constant 0 : i32
    %c0_i32_1 = arith.constant 0 : i32
    return %c0_i32, %c0_i32_0 : i32, i32
  }
  func.func @transform_4(%arg0: i32) -> (i32, i32) {
    %c0_i32 = arith.constant 0 : i32
    %c0_i32_0 = arith.constant 0 : i32
    %c0_i32_1 = arith.constant 0 : i32
    return %c0_i32, %c0_i32_0 : i32, i32
  }
  func.func @transform_5(%arg0: i32) -> (i32, i32) {
    %c0_i32 = arith.constant 0 : i32
    %c0_i32_0 = arith.constant 0 : i32
    %c0_i32_1 = arith.constant 0 : i32
    return %c0_i32, %c0_i32_0 : i32, i32
  }
  func.func @transform_6(%arg0: i32) -> (i32, i32) {
    %c0_i32 = arith.constant 0 : i32
    %c0_i32_0 = arith.constant 0 : i32
    %c0_i32_1 = arith.constant 0 : i32
    return %c0_i32, %c0_i32_0 : i32, i32
  }
  func.func @transform_7(%arg0: i32) -> (i32, i32) {
    %c0_i32 = arith.constant 0 : i32
    %c0_i32_0 = arith.constant 0 : i32
    return %arg0, %c0_i32 : i32, i32
  }
}

module attributes {stable_mosaic.version = 11 : i64} {
  func.func @adapter_kernel(%arg0: i32, %arg1: memref<8x128xf32, #tpu.memory_space<vmem>>, %arg2: memref<128x256xf32, #tpu.memory_space<vmem>>, %arg3: memref<1x256xf32, #tpu.memory_space<vmem>>, %arg4: memref<1x256xf32, #tpu.memory_space<vmem>>, %arg5: memref<1x256xf32, #tpu.memory_space<vmem>>, %arg6: memref<256x128xf32, #tpu.memory_space<vmem>>, %arg7: memref<1x128xf32, #tpu.memory_space<vmem>>, %arg8: memref<8x128xf32, #tpu.memory_space<vmem>>) attributes {dimension_semantics = [#tpu.dimension_semantics<parallel>], iteration_bounds = array<i64: 2>, scalar_prefetch = 0 : i64, scratch_operands = 0 : i64, tpu.core_type = #tpu.core_type<tc>, window_params = [{transform_indices = @transform_0, window_bounds = array<i64: 8, 128>}, {pipeline_mode = #tpu.pipeline_mode<synchronous>, transform_indices = @transform_1, window_bounds = array<i64: 128, 256>}, {pipeline_mode = #tpu.pipeline_mode<synchronous>, transform_indices = @transform_2, window_bounds = array<i64: 1, 256>}, {pipeline_mode = #tpu.pipeline_mode<synchronous>, transform_indices = @transform_3, window_bounds = array<i64: 1, 256>}, {pipeline_mode = #tpu.pipeline_mode<synchronous>, transform_indices = @transform_4, window_bounds = array<i64: 1, 256>}, {pipeline_mode = #tpu.pipeline_mode<synchronous>, transform_indices = @transform_5, window_bounds = array<i64: 256, 128>}, {pipeline_mode = #tpu.pipeline_mode<synchronous>, transform_indices = @transform_6, window_bounds = array<i64: 1, 128>}, {transform_indices = @transform_7, window_bounds = array<i64: 8, 128>}]} {
    %c0 = arith.constant 0 : index
    %c0_0 = arith.constant 0 : index
    %0 = vector.load %arg3[%c0, %c0_0] : memref<1x256xf32, #tpu.memory_space<vmem>>, vector<1x256xf32>
    %c0_1 = arith.constant 0 : index
    %c0_2 = arith.constant 0 : index
    %1 = vector.load %arg4[%c0_1, %c0_2] : memref<1x256xf32, #tpu.memory_space<vmem>>, vector<1x256xf32>
    %c0_3 = arith.constant 0 : index
    %c0_4 = arith.constant 0 : index
    %2 = vector.load %arg5[%c0_3, %c0_4] : memref<1x256xf32, #tpu.memory_space<vmem>>, vector<1x256xf32>
    %c0_5 = arith.constant 0 : index
    %c0_6 = arith.constant 0 : index
    %3 = vector.load %arg7[%c0_5, %c0_6] : memref<1x128xf32, #tpu.memory_space<vmem>>, vector<1x128xf32>
    %c0_7 = arith.constant 0 : index
    %c0_8 = arith.constant 0 : index
    %4 = vector.load %arg1[%c0_7, %c0_8] : memref<8x128xf32, #tpu.memory_space<vmem>>, vector<8x128xf32>
    %c0_9 = arith.constant 0 : index
    %c0_10 = arith.constant 0 : index
    %5 = vector.load %arg2[%c0_9, %c0_10] : memref<128x256xf32, #tpu.memory_space<vmem>>, vector<128x256xf32>
    %cst = arith.constant dense<0.000000e+00> : vector<8x256xf32>
    %6 = tpu.matmul %4, %5, %cst {dimension_numbers = #tpu.dot_dimension_numbers<[1], [0], [0], [1], [0, 0, 1, 1], [], []>} : vector<8x128xf32>, vector<128x256xf32>, vector<8x256xf32> -> vector<8x256xf32>
    %7 = vector.broadcast %0 : vector<1x256xf32> to vector<8x256xf32>
    %8 = arith.addf %6, %7 : vector<8x256xf32>
    %cst_11 = arith.constant 1.702000e+00 : f32
    %9 = vector.broadcast %cst_11 : f32 to vector<8x256xf32>
    %10 = arith.mulf %9, %8 : vector<8x256xf32>
    %11 = arith.negf %10 : vector<8x256xf32>
    %12 = math.exp %11 : vector<8x256xf32>
    %cst_12 = arith.constant 1.000000e+00 : f32
    %13 = vector.broadcast %cst_12 : f32 to vector<8x256xf32>
    %14 = arith.addf %13, %12 : vector<8x256xf32>
    %15 = arith.divf %13, %14 : vector<8x256xf32>
    %16 = arith.mulf %8, %15 : vector<8x256xf32>
    %cst_13 = arith.constant dense<0.000000e+00> : vector<8xf32>
    %17 = vector.multi_reduction <add>, %16, %cst_13 [1] : vector<8x256xf32> to vector<8xf32>
    %18 = vector.shape_cast %17 : vector<8xf32> to vector<8x1xf32>
    %cst_14 = arith.constant 2.560000e+02 : f32
    %19 = vector.broadcast %cst_14 : f32 to vector<8x1xf32>
    %20 = arith.divf %18, %19 : vector<8x1xf32>
    %21 = arith.mulf %16, %16 : vector<8x256xf32>
    %cst_15 = arith.constant dense<0.000000e+00> : vector<8xf32>
    %22 = vector.multi_reduction <add>, %21, %cst_15 [1] : vector<8x256xf32> to vector<8xf32>
    %23 = vector.shape_cast %22 : vector<8xf32> to vector<8x1xf32>
    %cst_16 = arith.constant 2.560000e+02 : f32
    %24 = vector.broadcast %cst_16 : f32 to vector<8x1xf32>
    %25 = arith.divf %23, %24 : vector<8x1xf32>
    %26 = arith.mulf %20, %20 : vector<8x1xf32>
    %27 = arith.subf %25, %26 : vector<8x1xf32>
    %cst_17 = arith.constant 0.000000e+00 : f32
    %28 = vector.broadcast %cst_17 : f32 to vector<8x1xf32>
    %29 = arith.maximumf %27, %28 : vector<8x1xf32>
    %30 = vector.broadcast %20 : vector<8x1xf32> to vector<8x256xf32>
    %31 = arith.subf %16, %30 : vector<8x256xf32>
    %cst_18 = arith.constant 9.99999974E-6 : f32
    %32 = vector.broadcast %cst_18 : f32 to vector<8x1xf32>
    %33 = arith.addf %29, %32 : vector<8x1xf32>
    %34 = math.rsqrt %33 : vector<8x1xf32>
    %35 = vector.broadcast %34 : vector<8x1xf32> to vector<8x256xf32>
    %36 = arith.mulf %31, %35 : vector<8x256xf32>
    %37 = vector.broadcast %1 : vector<1x256xf32> to vector<8x256xf32>
    %38 = arith.mulf %36, %37 : vector<8x256xf32>
    %39 = vector.broadcast %2 : vector<1x256xf32> to vector<8x256xf32>
    %40 = arith.addf %38, %39 : vector<8x256xf32>
    %c0_19 = arith.constant 0 : index
    %c0_20 = arith.constant 0 : index
    %41 = vector.load %arg6[%c0_19, %c0_20] : memref<256x128xf32, #tpu.memory_space<vmem>>, vector<256x128xf32>
    %cst_21 = arith.constant dense<0.000000e+00> : vector<8x128xf32>
    %42 = tpu.matmul %40, %41, %cst_21 {dimension_numbers = #tpu.dot_dimension_numbers<[1], [0], [0], [1], [0, 0, 1, 1], [], []>} : vector<8x256xf32>, vector<256x128xf32>, vector<8x128xf32> -> vector<8x128xf32>
    %43 = vector.broadcast %3 : vector<1x128xf32> to vector<8x128xf32>
    %44 = arith.addf %42, %43 : vector<8x128xf32>
    %cst_22 = arith.constant 1.702000e+00 : f32
    %45 = vector.broadcast %cst_22 : f32 to vector<8x128xf32>
    %46 = arith.mulf %45, %44 : vector<8x128xf32>
    %47 = arith.negf %46 : vector<8x128xf32>
    %48 = math.exp %47 : vector<8x128xf32>
    %cst_23 = arith.constant 1.000000e+00 : f32
    %49 = vector.broadcast %cst_23 : f32 to vector<8x128xf32>
    %50 = arith.addf %49, %48 : vector<8x128xf32>
    %51 = arith.divf %49, %50 : vector<8x128xf32>
    %52 = arith.mulf %44, %51 : vector<8x128xf32>
    %53 = arith.addf %52, %4 : vector<8x128xf32>
    %c0_24 = arith.constant 0 : index
    %c0_25 = arith.constant 0 : index
    %54 = vector.load %arg8[%c0_24, %c0_25] : memref<8x128xf32, #tpu.memory_space<vmem>>, vector<8x128xf32>
    tpu.vector_store %arg8[%c0_24, %c0_25], %53 {strides = array<i32>} : memref<8x128xf32, #tpu.memory_space<vmem>>, vector<8x128xf32>,
    return
  }
  func.func @transform_0(%arg0: i32) -> (i32, i32) {
    %c0_i32 = arith.constant 0 : i32
    %c0_i32_0 = arith.constant 0 : i32
    return %arg0, %c0_i32 : i32, i32
  }
  func.func @transform_1(%arg0: i32) -> (i32, i32) {
    %c0_i32 = arith.constant 0 : i32
    %c0_i32_0 = arith.constant 0 : i32
    %c0_i32_1 = arith.constant 0 : i32
    return %c0_i32, %c0_i32_0 : i32, i32
  }
  func.func @transform_2(%arg0: i32) -> (i32, i32) {
    %c0_i32 = arith.constant 0 : i32
    %c0_i32_0 = arith.constant 0 : i32
    %c0_i32_1 = arith.constant 0 : i32
    return %c0_i32, %c0_i32_0 : i32, i32
  }
  func.func @transform_3(%arg0: i32) -> (i32, i32) {
    %c0_i32 = arith.constant 0 : i32
    %c0_i32_0 = arith.constant 0 : i32
    %c0_i32_1 = arith.constant 0 : i32
    return %c0_i32, %c0_i32_0 : i32, i32
  }
  func.func @transform_4(%arg0: i32) -> (i32, i32) {
    %c0_i32 = arith.constant 0 : i32
    %c0_i32_0 = arith.constant 0 : i32
    %c0_i32_1 = arith.constant 0 : i32
    return %c0_i32, %c0_i32_0 : i32, i32
  }
  func.func @transform_5(%arg0: i32) -> (i32, i32) {
    %c0_i32 = arith.constant 0 : i32
    %c0_i32_0 = arith.constant 0 : i32
    %c0_i32_1 = arith.constant 0 : i32
    return %c0_i32, %c0_i32_0 : i32, i32
  }
  func.func @transform_6(%arg0: i32) -> (i32, i32) {
    %c0_i32 = arith.constant 0 : i32
    %c0_i32_0 = arith.constant 0 : i32
    %c0_i32_1 = arith.constant 0 : i32
    return %c0_i32, %c0_i32_0 : i32, i32
  }
  func.func @transform_7(%arg0: i32) -> (i32, i32) {
    %c0_i32 = arith.constant 0 : i32
    %c0_i32_0 = arith.constant 0 : i32
    return %arg0, %c0_i32 : i32, i32
  }
}

</mosaic_0001>

<llo_original>
// kernel: _adapter_apply.1
$region0: #{_adapter_apply.1}
  #allocation0 [shape = 'u32[]', space=smem, size = 0x4, offset = 0x4, fixed_abs, tag = 'smem constant byte address 0x4 - core index']
  #allocation1 [shape = 'u32[144,128]{1,0:T(1,128)}', space=vmem, size = 0x12000, scoped, tag = 'internal scratch']
  %s0 = inlined_call_operand.vmem [shape: f32[16,128], index: 0, kind: input, shape index: {}]
  %s1 = inlined_call_operand.hbm [shape: f32[128,256], index: 1, kind: input, shape index: {}]
  %s2 = inlined_call_operand.vmem [shape: f32[1,256], index: 2, kind: input, shape index: {}]
  %s3 = inlined_call_operand.vmem [shape: f32[1,256], index: 3, kind: input, shape index: {}]
  %s4 = inlined_call_operand.vmem [shape: f32[1,256], index: 4, kind: input, shape index: {}]
  %s5 = inlined_call_operand.hbm [shape: f32[256,128], index: 5, kind: input, shape index: {}]
  %s6 = inlined_call_operand.vmem [shape: f32[1,128], index: 6, kind: input, shape index: {}]
  %s7 = inlined_call_operand.hbm [shape: f32[16,128], index: 7, kind: output, shape index: {}]
  %s8 = sld [smem:[#allocation0]]
  $region69: #{_adapter_apply.1} parent=0
    _
  %s10 = ssub.s32 1, %s8
  %s11 = scalar_select 0, %s10, %s8
  $region1: #{_adapter_apply.1} parent=0
    #allocation2 [shape = 'u8[131072]{0}', space=vmem, size = 0x20000, scoped, tag = 'input window, operand 1, single buffered']
    #allocation3 [shape = 's32[2]{0}', space=sflag, size = 0x8, scoped, tag = 'scoped memory for _adapter_apply.1']
    #allocation4 [shape = 's32[2]{0}', space=sflag, size = 0x8, scoped, tag = 'scoped memory for _adapter_apply.1']
    #allocation5 [shape = 'u8[131072]{0}', space=vmem, size = 0x20000, scoped, tag = 'input window, operand 5, single buffered']
    #allocation6 [shape = 's32[1]{0}', space=sflag, size = 0x4, scoped, tag = 'scoped memory for _adapter_apply.1']
    #allocation7 [shape = 'u8[8192]{0}', space=vmem, size = 0x2000, scoped, tag = 'output window, operand 0']
    %12 = vsyncpa [#allocation3], 0
    %13 = vsyncpa [#allocation6], 0
    %14 = vsyncpa [#allocation4], 0
    %s15 = scalar_lea.sflag [#allocation4], 1
    %16 = vsyncpa %s15, 0
    loop: start=0, step=1, limit=4
    $region2: #{_adapter_apply.1} parent=1 // loop_pre_header
      _
    $region3: #{_adapter_apply.1} parent=1 // loop_header
      %s18 = sphi 0, %s22
      %p19 = scmp.ge.s32.totalorder %s18, 4
      %s28 = sphi 0, %s30
      %s31 = sphi 0, %s28
      %s32 = sphi 0, %s31
      %s48 = sphi 0, %s32
      %s52 = sphi 0, %s52
      %s54 = sphi 0, %s52
      %s55 = sphi 0, %s54
      %s69 = sphi 0, %s55
      %s73 = sphi 0, %s73
      %s75 = sphi 0, %s73
      %s76 = sphi 0, %s75
      %s90 = sphi 0, %s76
      %s94 = sphi 0, %s94
      %s96 = sphi 0, %s94
      %s97 = sphi 0, %s96
      %s111 = sphi 0, %s97
      %s115 = sphi 0, %s115
      %s117 = sphi 0, %s115
      %s118 = sphi 0, %s117
      %s132 = sphi 0, %s118
      %s136 = sphi 0, %s136
      %s138 = sphi 0, %s136
      %s139 = sphi 0, %s138
      %s153 = sphi 0, %s139
      %s157 = sphi 0, %s157
      %s159 = sphi 0, %s157
      %s160 = sphi 0, %s159
      %s174 = sphi 0, %s160
      %s180 = sphi 0, %s182
      %s183 = sphi 0, %s180
      %s184 = sphi 0, %s183
      %s200 = sphi 0, %s184
    $region4: #{_adapter_apply.1} parent=1 // loop_header_branch
      %21 = sbr.rel (%p19) target = $region8
    $region5: #{_adapter_apply.1} parent=1 // loop_body
      %s23 = ssub.s32 %s18, 1
      %s24 = ssub.s32 %s18, 2
      %s25 = sadd.s32 %s18, 1
      %s26 = ssub.s32 %s18, %s25
      %p27 = scmp.eq.s32.totalorder %s26, 0
      %s29 = sadd.s32 %s28, 1
      %s30 = scalar_select %p27, %s28, %s29
      %p33 = pneg %p27
      %p34 = scmp.eq.s32.totalorder %s18, 1
      %p35 = por %p33, %p34
      %p36 = scmp.ne.s32.totalorder %s28, %s31
      %p37 = scmp.eq.s32.totalorder %s18, 0
      %p38 = por %p36, %p37
      %p39 = scmp.ne.s32.totalorder %s28, %s31
      %p40 = scmp.eq.s32.totalorder %s23, 1
      %p41 = por %p39, %p40
      %p42 = scmp.ne.s32.totalorder %s31, %s32
      %p43 = scmp.eq.s32.totalorder %s23, 0
      %p44 = por %p42, %p43
      %p45 = scmp.ne.s32.totalorder %s31, %s32
      %p46 = scmp.eq.s32.totalorder %s24, 1
      %p47 = por %p45, %p46
      %p49 = scmp.ne.s32.totalorder %s32, %s48
      %p50 = scmp.eq.s32.totalorder %s24, 0
      %p51 = por %p49, %p50
      %s53 = sadd.s32 %s52, 1
      %p56 = scmp.eq.s32.totalorder %s18, 1
      %p57 = scmp.ne.s32.totalorder %s52, %s54
      %p58 = scmp.eq.s32.totalorder %s18, 0
      %p59 = por %p57, %p58
      %p60 = scmp.ne.s32.totalorder %s52, %s54
      %p61 = scmp.eq.s32.totalorder %s23, 1
      %p62 = por %p60, %p61
      %p63 = scmp.ne.s32.totalorder %s54, %s55
      %p64 = scmp.eq.s32.totalorder %s23, 0
      %p65 = por %p63, %p64
      %p66 = scmp.ne.s32.totalorder %s54, %s55
      %p67 = scmp.eq.s32.totalorder %s24, 1
      %p68 = por %p66, %p67
      %p70 = scmp.ne.s32.totalorder %s55, %s69
      %p71 = scmp.eq.s32.totalorder %s24, 0
      %p72 = por %p70, %p71
      %s74 = sadd.s32 %s73, 1
      %p77 = scmp.eq.s32.totalorder %s18, 1
      %p78 = scmp.ne.s32.totalorder %s73, %s75
      %p79 = scmp.eq.s32.totalorder %s18, 0
      %p80 = por %p78, %p79
      %p81 = scmp.ne.s32.totalorder %s73, %s75
      %p82 = scmp.eq.s32.totalorder %s23, 1
      %p83 = por %p81, %p82
      %p84 = scmp.ne.s32.totalorder %s75, %s76
      %p85 = scmp.eq.s32.totalorder %s23, 0
      %p86 = por %p84, %p85
      %p87 = scmp.ne.s32.totalorder %s75, %s76
      %p88 = scmp.eq.s32.totalorder %s24, 1
      %p89 = por %p87, %p88
      %p91 = scmp.ne.s32.totalorder %s76, %s90
      %p92 = scmp.eq.s32.totalorder %s24, 0
      %p93 = por %p91, %p92
      %s95 = sadd.s32 %s94, 1
      %p98 = scmp.eq.s32.totalorder %s18, 1
      %p99 = scmp.ne.s32.totalorder %s94, %s96
      %p100 = scmp.eq.s32.totalorder %s18, 0
      %p101 = por %p99, %p100
      %p102 = scmp.ne.s32.totalorder %s94, %s96
      %p103 = scmp.eq.s32.totalorder %s23, 1
      %p104 = por %p102, %p103
      %p105 = scmp.ne.s32.totalorder %s96, %s97
      %p106 = scmp.eq.s32.totalorder %s23, 0
      %p107 = por %p105, %p106
      %p108 = scmp.ne.s32.totalorder %s96, %s97
      %p109 = scmp.eq.s32.totalorder %s24, 1
      %p110 = por %p108, %p109
      %p112 = scmp.ne.s32.totalorder %s97, %s111
      %p113 = scmp.eq.s32.totalorder %s24, 0
      %p114 = por %p112, %p113
      %s116 = sadd.s32 %s115, 1
      %p119 = scmp.eq.s32.totalorder %s18, 1
      %p120 = scmp.ne.s32.totalorder %s115, %s117
      %p121 = scmp.eq.s32.totalorder %s18, 0
      %p122 = por %p120, %p121
      %p123 = scmp.ne.s32.totalorder %s115, %s117
      %p124 = scmp.eq.s32.totalorder %s23, 1
      %p125 = por %p123, %p124
      %p126 = scmp.ne.s32.totalorder %s117, %s118
      %p127 = scmp.eq.s32.totalorder %s23, 0
      %p128 = por %p126, %p127
      %p129 = scmp.ne.s32.totalorder %s117, %s118
      %p130 = scmp.eq.s32.totalorder %s24, 1
      %p131 = por %p129, %p130
      %p133 = scmp.ne.s32.totalorder %s118, %s132
      %p134 = scmp.eq.s32.totalorder %s24, 0
      %p135 = por %p133, %p134
      %s137 = sadd.s32 %s136, 1
      %p140 = scmp.eq.s32.totalorder %s18, 1
      %p141 = scmp.ne.s32.totalorder %s136, %s138
      %p142 = scmp.eq.s32.totalorder %s18, 0
      %p143 = por %p141, %p142
      %p144 = scmp.ne.s32.totalorder %s136, %s138
      %p145 = scmp.eq.s32.totalorder %s23, 1
      %p146 = por %p144, %p145
      %p147 = scmp.ne.s32.totalorder %s138, %s139
      %p148 = scmp.eq.s32.totalorder %s23, 0
      %p149 = por %p147, %p148
      %p150 = scmp.ne.s32.totalorder %s138, %s139
      %p151 = scmp.eq.s32.totalorder %s24, 1
      %p152 = por %p150, %p151
      %p154 = scmp.ne.s32.totalorder %s139, %s153
      %p155 = scmp.eq.s32.totalorder %s24, 0
      %p156 = por %p154, %p155
      %s158 = sadd.s32 %s157, 1
      %p161 = scmp.eq.s32.totalorder %s18, 1
      %p162 = scmp.ne.s32.totalorder %s157, %s159
      %p163 = scmp.eq.s32.totalorder %s18, 0
      %p164 = por %p162, %p163
      %p165 = scmp.ne.s32.totalorder %s157, %s159
      %p166 = scmp.eq.s32.totalorder %s23, 1
      %p167 = por %p165, %p166
      %p168 = scmp.ne.s32.totalorder %s159, %s160
      %p169 = scmp.eq.s32.totalorder %s23, 0
      %p170 = por %p168, %p169
      %p171 = scmp.ne.s32.totalorder %s159, %s160
      %p172 = scmp.eq.s32.totalorder %s24, 1
      %p173 = por %p171, %p172
      %p175 = scmp.ne.s32.totalorder %s160, %s174
      %p176 = scmp.eq.s32.totalorder %s24, 0
      %p177 = por %p175, %p176
      %s178 = ssub.s32 %s18, %s25
      %p179 = scmp.eq.s32.totalorder %s178, 0
      %s181 = sadd.s32 %s180, 1
      %s182 = scalar_select %p179, %s180, %s181
      %p185 = pneg %p179
      %p186 = scmp.eq.s32.totalorder %s18, 1
      %p187 = por %p185, %p186
      %p188 = scmp.ne.s32.totalorder %s180, %s183
      %p189 = scmp.eq.s32.totalorder %s18, 0
      %p190 = por %p188, %p189
      %p191 = scmp.ne.s32.totalorder %s180, %s183
      %p192 = scmp.eq.s32.totalorder %s23, 1
      %p193 = por %p191, %p192
      %p194 = scmp.ne.s32.totalorder %s183, %s184
      %p195 = scmp.eq.s32.totalorder %s23, 0
      %p196 = por %p194, %p195
      %p197 = scmp.ne.s32.totalorder %s183, %s184
      %p198 = scmp.eq.s32.totalorder %s24, 1
      %p199 = por %p197, %p198
      %p201 = scmp.ne.s32.totalorder %s184, %s200
      %p202 = scmp.eq.s32.totalorder %s24, 0
      %p203 = por %p201, %p202
      %p204 = scmp.le.s32.totalorder 1, %s18
      %p205 = scmp.lt.s32.totalorder %s18, 3
      %p206 = pnand %p204, %p205
      %p207 = pneg %p206
      // Predicated region
      $region9: #{_adapter_apply.1} parent=5 // pred_check
        _
      $region10: #{_adapter_apply.1} parent=5 // pred_check_branch
        %209 = sbr.rel (%p206) target = $region12
      $region11: #{_adapter_apply.1} parent=5 // pred_region
        %s210 = ssub.s32 %s18, 1
        // Predicated region
        $region13: #{_adapter_apply.1} parent=11 // pred_check
          %p211 = pneg %p65
        $region14: #{_adapter_apply.1} parent=11 // pred_check_branch
          %213 = sbr.rel (%p211) target = $region16
        $region15: #{_adapter_apply.1} parent=11 // pred_region
          %s215 = ssub.s32 4096, 4096
          %216 = vsyncadd [#allocation3], %s215
          %s217 = sshll.u32 [#allocation2], 4
          %s218 = int_to_ptr.vmem [resolvable:$true] %s217
          %223 = dma.hbm_to_vmem [thread:$0]  %s1, 4096, %s218, [#allocation3], 256, 256, 16
        $region16: #{_adapter_apply.1} parent=11 // pred_fallthru
          _
        // Predicated region
        $region17: #{_adapter_apply.1} parent=11 // pred_check
          %p224 = pneg %p86
        $region18: #{_adapter_apply.1} parent=11 // pred_check_branch
          %226 = sbr.rel (%p224) target = $region20
        $region19: #{_adapter_apply.1} parent=11 // pred_region
          _
        $region20: #{_adapter_apply.1} parent=11 // pred_fallthru
          _
        // Predicated region
        $region21: #{_adapter_apply.1} parent=11 // pred_check
          %p227 = pneg %p107
        $region22: #{_adapter_apply.1} parent=11 // pred_check_branch
          %229 = sbr.rel (%p227) target = $region24
        $region23: #{_adapter_apply.1} parent=11 // pred_region
          _
        $region24: #{_adapter_apply.1} parent=11 // pred_fallthru
          _
        // Predicated region
        $region25: #{_adapter_apply.1} parent=11 // pred_check
          %p230 = pneg %p128
        $region26: #{_adapter_apply.1} parent=11 // pred_check_branch
          %232 = sbr.rel (%p230) target = $region28
        $region27: #{_adapter_apply.1} parent=11 // pred_region
          _
        $region28: #{_adapter_apply.1} parent=11 // pred_fallthru
          _
        // Predicated region
        $region29: #{_adapter_apply.1} parent=11 // pred_check
          %p233 = pneg %p149
        $region30: #{_adapter_apply.1} parent=11 // pred_check_branch
          %235 = sbr.rel (%p233) target = $region32
        $region31: #{_adapter_apply.1} parent=11 // pred_region
          %s237 = ssub.s32 4096, 4096
          %238 = vsyncadd [#allocation6], %s237
          %s239 = sshll.u32 [#allocation5], 4
          %s240 = int_to_ptr.vmem [resolvable:$true] %s239
          %245 = dma.hbm_to_vmem [thread:$0]  %s5, 4096, %s240, [#allocation6], 128, 128, 8
        $region32: #{_adapter_apply.1} parent=11 // pred_fallthru
          _
        // Predicated region
        $region33: #{_adapter_apply.1} parent=11 // pred_check
          %p246 = pneg %p170
        $region34: #{_adapter_apply.1} parent=11 // pred_check_branch
          %248 = sbr.rel (%p246) target = $region36
        $region35: #{_adapter_apply.1} parent=11 // pred_region
          _
        $region36: #{_adapter_apply.1} parent=11 // pred_fallthru
          _
      $region12: #{_adapter_apply.1} parent=5 // pred_fallthru
        _
      %p249 = scmp.lt.s32.totalorder %s18, 2
      // Predicated region
      $region37: #{_adapter_apply.1} parent=5 // pred_check
        %p250 = pneg %p249
      $region38: #{_adapter_apply.1} parent=5 // pred_check_branch
        %252 = sbr.rel (%p250) target = $region40
      $region39: #{_adapter_apply.1} parent=5 // pred_region
        // Predicated region
        $region41: #{_adapter_apply.1} parent=39 // pred_check
          %p253 = pneg %p38
        $region42: #{_adapter_apply.1} parent=39 // pred_check_branch
          %255 = sbr.rel (%p253) target = $region44
        $region43: #{_adapter_apply.1} parent=39 // pred_region
          %p256 = scmp.lt.s32.totalorder %s18, 1
          %s257 = scalar_select %p256, %s18, 1
          %s258 = smul.addr %s257, 8
          %s259 = scalar_lea.vmem %s0, %s258
        $region44: #{_adapter_apply.1} parent=39 // pred_fallthru
          _
      $region40: #{_adapter_apply.1} parent=5 // pred_fallthru
        _
      %p260 = scmp.le.s32.totalorder 1, %s18
      %p261 = scmp.lt.s32.totalorder %s18, 3
      %p262 = pnand %p260, %p261
      %p263 = pneg %p262
      // Predicated region
      $region45: #{_adapter_apply.1} parent=5 // pred_check
        _
      $region46: #{_adapter_apply.1} parent=5 // pred_check_branch
        %265 = sbr.rel (%p262) target = $region48
      $region47: #{_adapter_apply.1} parent=5 // pred_region
        %s266 = ssub.s32 %s18, 1
        // Predicated region
        $region49: #{_adapter_apply.1} parent=47 // pred_check
          %p267 = pneg %p65
        $region50: #{_adapter_apply.1} parent=47 // pred_check_branch
          %269 = sbr.rel (%p267) target = $region52
        $region51: #{_adapter_apply.1} parent=47 // pred_region
          %270 = dma.done [#allocation3], 4096
        $region52: #{_adapter_apply.1} parent=47 // pred_fallthru
          _
        // Predicated region
        $region53: #{_adapter_apply.1} parent=47 // pred_check
          %p271 = pneg %p149
        $region54: #{_adapter_apply.1} parent=47 // pred_check_branch
          %273 = sbr.rel (%p271) target = $region56
        $region55: #{_adapter_apply.1} parent=47 // pred_region
          %274 = dma.done [#allocation6], 4096
        $region56: #{_adapter_apply.1} parent=47 // pred_fallthru
          _
        %p275 = scmp.lt.s32.totalorder %s23, 1
        %s276 = scalar_select %p275, %s23, 1
        %s277 = smul.addr %s276, 8
        %s278 = scalar_lea.vmem %s0, %s277
        %p279 = pneg %p44
        %p280 = pneg %p41
        %p281 = pneg %p65
        %p282 = pneg %p62
        %p283 = pneg %p86
        %p284 = pneg %p83
        %p285 = pneg %p107
        %p286 = pneg %p104
        %p287 = pneg %p128
        %p288 = pneg %p125
        %p289 = pneg %p149
        %p290 = pneg %p146
        %p291 = pneg %p170
        %p292 = pneg %p167
        %p293 = pneg %p196
        %p294 = pneg %p193
        %s295 = sand.u32 %s183, 1
        %s296 = scalar_lea.sflag [#allocation4], %s295
        %s297 = sand.u32 %s183, 1
        %s298 = smul.addr %s297, 8
        %s299 = scalar_lea.vmem [#allocation7], %s298
        %p300 = scmp.lt.s32.totalorder %s23, 1
        %s301 = scalar_select %p300, %s23, 1
        %s302 = smul.addr %s301, 8
        %s303 = scalar_lea.vmem %s0, %s302
        %v304 = vld [vmem:[%s2] sm:$0x3]
        %v305 = vld [vmem:[%s3] sm:$0x3]
        %v306 = vld [vmem:[%s4] sm:$0x3]
        %v307 = vld [vmem:[%s6] sm:$0x1]
        %v308 = vld [vmem:[%s303] sm:$0xff]
        %v309 = vld [vmem:[#allocation2] sm:$0xff]
        %v310 = vld [vmem:[#allocation2 + $0x8] sm:$0xff]
        %v311 = vld [vmem:[#allocation2 + $0x10] sm:$0xff]
        %v312 = vld [vmem:[#allocation2 + $0x18] sm:$0xff]
        %v313 = vld [vmem:[#allocation2 + $0x20] sm:$0xff]
        %v314 = vld [vmem:[#allocation2 + $0x28] sm:$0xff]
        %v315 = vld [vmem:[#allocation2 + $0x30] sm:$0xff]
        %v316 = vld [vmem:[#allocation2 + $0x38] sm:$0xff]
        %v317 = vld [vmem:[#allocation2 + $0x40] sm:$0xff]
        %v318 = vld [vmem:[#allocation2 + $0x48] sm:$0xff]
        %v319 = vld [vmem:[#allocation2 + $0x50] sm:$0xff]
        %v320 = vld [vmem:[#allocation2 + $0x58] sm:$0xff]
        %v321 = vld [vmem:[#allocation2 + $0x60] sm:$0xff]
        %v322 = vld [vmem:[#allocation2 + $0x68] sm:$0xff]
        %v323 = vld [vmem:[#allocation2 + $0x70] sm:$0xff]
        %v324 = vld [vmem:[#allocation2 + $0x78] sm:$0xff]
        %v325 = vld [vmem:[#allocation2 + $0x80] sm:$0xff]
        %v326 = vld [vmem:[#allocation2 + $0x88] sm:$0xff]
        %v327 = vld [vmem:[#allocation2 + $0x90] sm:$0xff]
        %v328 = vld [vmem:[#allocation2 + $0x98] sm:$0xff]
        %v329 = vld [vmem:[#allocation2 + $0xa0] sm:$0xff]
        %v330 = vld [vmem:[#allocation2 + $0xa8] sm:$0xff]
        %v331 = vld [vmem:[#allocation2 + $0xb0] sm:$0xff]
        %v332 = vld [vmem:[#allocation2 + $0xb8] sm:$0xff]
        %v333 = vld [vmem:[#allocation2 + $0xc0] sm:$0xff]
        %v334 = vld [vmem:[#allocation2 + $0xc8] sm:$0xff]
        %v335 = vld [vmem:[#allocation2 + $0xd0] sm:$0xff]
        %v336 = vld [vmem:[#allocation2 + $0xd8] sm:$0xff]
        %v337 = vld [vmem:[#allocation2 + $0xe0] sm:$0xff]
        %v338 = vld [vmem:[#allocation2 + $0xe8] sm:$0xff]
        %v339 = vld [vmem:[#allocation2 + $0xf0] sm:$0xff]
        %v340 = vld [vmem:[#allocation2 + $0xf8] sm:$0xff]
        %v342 = vlaneseq
        %v343 = vshrl.u32 %v342, 7
        %v344 = vsub.s32 0, %v343
        %v345 = vrot.slane %v304, %v344
        %v346 = vlaneseq
        %v347 = vshrl.u32 %v346, 7
        %v348 = vsub.s32 1, %v347
        %v349 = vrot.slane %v304, %v348
        %352 = vmatprep.subr.mxu0 %v310
        %353 = vmatpush1.msra.mxu0 %v309
        %354 = vmatprep.subr.mxu0 %v312
        %355 = vmatpush1.msra.mxu0 %v311
        %356 = vmatprep.subr.mxu0 %v314
        %357 = vmatpush1.msra.mxu0 %v313
        %358 = vmatprep.subr.mxu0 %v316
        %359 = vmatpush1.msra.mxu0 %v315
        %360 = vmatprep.subr.mxu0 %v318
        %361 = vmatpush1.msra.mxu0 %v317
        %362 = vmatprep.subr.mxu0 %v320
        %363 = vmatpush1.msra.mxu0 %v319
        %364 = vmatprep.subr.mxu0 %v322
        %365 = vmatpush1.msra.mxu0 %v321
        %366 = vmatprep.subr.mxu0 %v324
        %367 = vmatpush1.msra.mxu0 %v323
        %368 = vmatprep.subr.mxu0 %v326
        %369 = vmatpush1.msra.mxu0 %v325
        %370 = vmatprep.subr.mxu0 %v328
        %371 = vmatpush1.msra.mxu0 %v327
        %372 = vmatprep.subr.mxu0 %v330
        %373 = vmatpush1.msra.mxu0 %v329
        %374 = vmatprep.subr.mxu0 %v332
        %375 = vmatpush1.msra.mxu0 %v331
        %376 = vmatprep.subr.mxu0 %v334
        %377 = vmatpush1.msra.mxu0 %v333
        %378 = vmatprep.subr.mxu0 %v336
        %379 = vmatpush1.msra.mxu0 %v335
        %380 = vmatprep.subr.mxu0 %v338
        %381 = vmatpush1.msra.mxu0 %v337
        %382 = vmatprep.subr.mxu0 %v340
        %383 = vmatpush1.msra.mxu0 %v339
        %384 = vmatprep.subr.mxu0 0.0
        %385 = vmatpush1.msra.mxu0 0.0
        %386 = vmatprep.subr.mxu0 0.0
        %387 = vmatpush1.msra.mxu0 0.0
        %388 = vmatprep.subr.mxu0 0.0
        %389 = vmatpush1.msra.mxu0 0.0
        %390 = vmatprep.subr.mxu0 0.0
        %391 = vmatpush1.msra.mxu0 0.0
        %392 = vmatprep.subr.mxu0 0.0
        %393 = vmatpush1.msra.mxu0 0.0
        %394 = vmatprep.subr.mxu0 0.0
        %395 = vmatpush1.msra.mxu0 0.0
        %396 = vmatprep.subr.mxu0 0.0
        %397 = vmatpush1.msra.mxu0 0.0
        %398 = vmatprep.subr.mxu0 0.0
        %399 = vmatpush1.msra.mxu0 0.0
        %400 = vmatprep.subr.mxu0 0.0
        %401 = vmatpush1.msra.mxu0 0.0
        %402 = vmatprep.subr.mxu0 0.0
        %403 = vmatpush1.msra.mxu0 0.0
        %404 = vmatprep.subr.mxu0 0.0
        %405 = vmatpush1.msra.mxu0 0.0
        %406 = vmatprep.subr.mxu0 0.0
        %407 = vmatpush1.msra.mxu0 0.0
        %408 = vmatprep.subr.mxu0 0.0
        %409 = vmatpush1.msra.mxu0 0.0
        %410 = vmatprep.subr.mxu0 0.0
        %411 = vmatpush1.msra.mxu0 0.0
        %412 = vmatprep.subr.mxu0 0.0
        %413 = vmatpush1.msra.mxu0 0.0
        %414 = vmatprep.subr.mxu0 0.0
        %415 = vmatpush1.msra.mxu0 0.0
        %416 = vmatprep.mubr.f32.mxu0 0.0
        %417 = vmatmul.mubr.f32.gmra.mrb[0].mxu0 %v308
        %v418 = vpop.f32.mrb[0].mxu0
        %v419 = vadd.f32 %v345, %v418
        %v420 = vpop.f32.mrb[0].mxu0
        %v421 = vadd.f32 %v349, %v420
        %422 = vdwg.mxu0
        %v423 = vmul.f32 %v419, 1.702
        %v424 = vmul.f32 %v421, 1.702
        %v425 = vxor.u32 %v423, 2147483648
        %v426 = vxor.u32 %v424, 2147483648
        %v427 = vmul.f32 %v425, 1.442695
        %v428 = vpow.pop %v427
        %v429 = vmul.f32 %v426, 1.442695
        %v430 = vpow.pop %v429
        %v431 = vadd.f32 %v428, 1.0
        %v432 = vadd.f32 %v430, 1.0
        %v433 = vrcp.pop %v431
        %v434 = vmul.f32 1.0, %v433
        %v435 = vrcp.pop %v432
        %v436 = vmul.f32 1.0, %v435
        %v437 = vmul.f32 %v419, %v434
        %v438 = vmul.f32 %v421, %v436
        %v439 = vadd.f32 %v437, %v438
        %440 = vadd.xlane.f32.xlu0 %v439
        %v441 = vpop.xlane.xlu0 %440
        %v442 = vrcp.pop 256.0
        %v443 = vmul.f32 %v441, %v442
        %v444 = vmul.f32 %v437, %v437
        %v445 = vmul.f32 %v438, %v438
        %v446 = vadd.f32 %v444, %v445
        %447 = vadd.xlane.f32.xlu0 %v446
        %v448 = vpop.xlane.xlu0 %447
        %v449 = vmul.f32 %v448, %v442
        %v450 = vmul.f32 %v443, %v443
        %v451 = vsub.f32 %v449, %v450
        %v452 = vmax.f32 %v451, 0.0
        %v453 = vsub.f32 %v437, %v443
        %v454 = vsub.f32 %v438, %v443
        %v455 = vadd.f32 %v452, 1e-05
        %v456 = vrsqrt.pop %v455
        %v457 = vmul.f32 %v453, %v456
        %v458 = vmul.f32 %v454, %v456
        %v460 = vlaneseq
        %v461 = vshrl.u32 %v460, 7
        %v462 = vsub.s32 0, %v461
        %v463 = vrot.slane %v305, %v462
        %v464 = vlaneseq
        %v465 = vshrl.u32 %v464, 7
        %v466 = vsub.s32 1, %v465
        %v467 = vrot.slane %v305, %v466
        %v470 = vmul.f32 %v457, %v463
        %v471 = vmul.f32 %v458, %v467
        %v473 = vlaneseq
        %v474 = vshrl.u32 %v473, 7
        %v475 = vsub.s32 0, %v474
        %v476 = vrot.slane %v306, %v475
        %v477 = vlaneseq
        %v478 = vshrl.u32 %v477, 7
        %v479 = vsub.s32 1, %v478
        %v480 = vrot.slane %v306, %v479
        %v483 = vadd.f32 %v470, %v476
        %v484 = vadd.f32 %v471, %v480
        %v485 = vld [vmem:[#allocation5] sm:$0xff]
        %v486 = vld [vmem:[#allocation5 + $0x8] sm:$0xff]
        %v487 = vld [vmem:[#allocation5 + $0x10] sm:$0xff]
        %v488 = vld [vmem:[#allocation5 + $0x18] sm:$0xff]
        %v489 = vld [vmem:[#allocation5 + $0x20] sm:$0xff]
        %v490 = vld [vmem:[#allocation5 + $0x28] sm:$0xff]
        %v491 = vld [vmem:[#allocation5 + $0x30] sm:$0xff]
        %v492 = vld [vmem:[#allocation5 + $0x38] sm:$0xff]
        %v493 = vld [vmem:[#allocation5 + $0x40] sm:$0xff]
        %v494 = vld [vmem:[#allocation5 + $0x48] sm:$0xff]
        %v495 = vld [vmem:[#allocation5 + $0x50] sm:$0xff]
        %v496 = vld [vmem:[#allocation5 + $0x58] sm:$0xff]
        %v497 = vld [vmem:[#allocation5 + $0x60] sm:$0xff]
        %v498 = vld [vmem:[#allocation5 + $0x68] sm:$0xff]
        %v499 = vld [vmem:[#allocation5 + $0x70] sm:$0xff]
        %v500 = vld [vmem:[#allocation5 + $0x78] sm:$0xff]
        %v501 = vld [vmem:[#allocation5 + $0x80] sm:$0xff]
        %v502 = vld [vmem:[#allocation5 + $0x88] sm:$0xff]
        %v503 = vld [vmem:[#allocation5 + $0x90] sm:$0xff]
        %v504 = vld [vmem:[#allocation5 + $0x98] sm:$0xff]
        %v505 = vld [vmem:[#allocation5 + $0xa0] sm:$0xff]
        %v506 = vld [vmem:[#allocation5 + $0xa8] sm:$0xff]
        %v507 = vld [vmem:[#allocation5 + $0xb0] sm:$0xff]
        %v508 = vld [vmem:[#allocation5 + $0xb8] sm:$0xff]
        %v509 = vld [vmem:[#allocation5 + $0xc0] sm:$0xff]
        %v510 = vld [vmem:[#allocation5 + $0xc8] sm:$0xff]
        %v511 = vld [vmem:[#allocation5 + $0xd0] sm:$0xff]
        %v512 = vld [vmem:[#allocation5 + $0xd8] sm:$0xff]
        %v513 = vld [vmem:[#allocation5 + $0xe0] sm:$0xff]
        %v514 = vld [vmem:[#allocation5 + $0xe8] sm:$0xff]
        %v515 = vld [vmem:[#allocation5 + $0xf0] sm:$0xff]
        %v516 = vld [vmem:[#allocation5 + $0xf8] sm:$0xff]
        %v518 = vlaneseq
        %v519 = vshrl.u32 %v518, 7
        %v520 = vsub.s32 0, %v519
        %v521 = vrot.slane %v307, %v520
        %523 = vmatprep.subr.mxu0 0.0
        %524 = vmatpush1.msra.mxu0 %v485
        %525 = vmatprep.subr.mxu0 0.0
        %526 = vmatpush1.msra.mxu0 %v486
        %527 = vmatprep.subr.mxu0 0.0
        %528 = vmatpush1.msra.mxu0 %v487
        %529 = vmatprep.subr.mxu0 0.0
        %530 = vmatpush1.msra.mxu0 %v488
        %531 = vmatprep.subr.mxu0 0.0
        %532 = vmatpush1.msra.mxu0 %v489
        %533 = vmatprep.subr.mxu0 0.0
        %534 = vmatpush1.msra.mxu0 %v490
        %535 = vmatprep.subr.mxu0 0.0
        %536 = vmatpush1.msra.mxu0 %v491
        %537 = vmatprep.subr.mxu0 0.0
        %538 = vmatpush1.msra.mxu0 %v492
        %539 = vmatprep.subr.mxu0 0.0
        %540 = vmatpush1.msra.mxu0 %v493
        %541 = vmatprep.subr.mxu0 0.0
        %542 = vmatpush1.msra.mxu0 %v494
        %543 = vmatprep.subr.mxu0 0.0
        %544 = vmatpush1.msra.mxu0 %v495
        %545 = vmatprep.subr.mxu0 0.0
        %546 = vmatpush1.msra.mxu0 %v496
        %547 = vmatprep.subr.mxu0 0.0
        %548 = vmatpush1.msra.mxu0 %v497
        %549 = vmatprep.subr.mxu0 0.0
        %550 = vmatpush1.msra.mxu0 %v498
        %551 = vmatprep.subr.mxu0 0.0
        %552 = vmatpush1.msra.mxu0 %v499
        %553 = vmatprep.subr.mxu0 0.0
        %554 = vmatpush1.msra.mxu0 %v500
        %555 = vmatprep.subr.mxu0 0.0
        %556 = vmatpush1.msra.mxu0 %v501
        %557 = vmatprep.subr.mxu0 0.0
        %558 = vmatpush1.msra.mxu0 %v502
        %559 = vmatprep.subr.mxu0 0.0
        %560 = vmatpush1.msra.mxu0 %v503
        %561 = vmatprep.subr.mxu0 0.0
        %562 = vmatpush1.msra.mxu0 %v504
        %563 = vmatprep.subr.mxu0 0.0
        %564 = vmatpush1.msra.mxu0 %v505
        %565 = vmatprep.subr.mxu0 0.0
        %566 = vmatpush1.msra.mxu0 %v506
        %567 = vmatprep.subr.mxu0 0.0
        %568 = vmatpush1.msra.mxu0 %v507
        %569 = vmatprep.subr.mxu0 0.0
        %570 = vmatpush1.msra.mxu0 %v508
        %571 = vmatprep.subr.mxu0 0.0
        %572 = vmatpush1.msra.mxu0 %v509
        %573 = vmatprep.subr.mxu0 0.0
        %574 = vmatpush1.msra.mxu0 %v510
        %575 = vmatprep.subr.mxu0 0.0
        %576 = vmatpush1.msra.mxu0 %v511
        %577 = vmatprep.subr.mxu0 0.0
        %578 = vmatpush1.msra.mxu0 %v512
        %579 = vmatprep.subr.mxu0 0.0
        %580 = vmatpush1.msra.mxu0 %v513
        %581 = vmatprep.subr.mxu0 0.0
        %582 = vmatpush1.msra.mxu0 %v514
        %583 = vmatprep.subr.mxu0 0.0
        %584 = vmatpush1.msra.mxu0 %v515
        %585 = vmatprep.subr.mxu0 0.0
        %586 = vmatpush1.msra.mxu0 %v516
        %587 = vmatprep.mubr.f32.mxu0 %v484
        %588 = vmatmul.mubr.f32.gmra.mrb[0].mxu0 %v483
        %v589 = vpop.f32.mrb[0].mxu0
        %v590 = vadd.f32 %v521, %v589
        %v591 = vpop.f32.mrb[0].mxu0
        %592 = vdwg.mxu0
        %v593 = vmul.f32 %v590, 1.702
        %v594 = vxor.u32 %v593, 2147483648
        %v595 = vmul.f32 %v594, 1.442695
        %v596 = vpow.pop %v595
        %v597 = vadd.f32 %v596, 1.0
        %v598 = vrcp.pop %v597
        %v599 = vmul.f32 1.0, %v598
        %v600 = vmul.f32 %v590, %v599
        %v601 = vadd.f32 %v600, %v308
        %602 = vst [vmem:[%s299] sm:$0xff] %v601
        %s603 = sand.u32 %s183, 1
        %s604 = scalar_lea.sflag [#allocation4], %s603
        %s605 = sand.u32 %s183, 1
        %s606 = smul.addr %s605, 8
        %s607 = scalar_lea.vmem [#allocation7], %s606
        // Predicated region
        $region57: #{_adapter_apply.1} parent=47 // pred_check
          %p608 = pneg %p193
        $region58: #{_adapter_apply.1} parent=47 // pred_check_branch
          %610 = sbr.rel (%p608) target = $region60
        $region59: #{_adapter_apply.1} parent=47 // pred_region
          %s612 = ssub.s32 128, 128
          %613 = vsyncadd %s604, %s612
          %s614 = smul.addr %s23, 128
          %s615 = scalar_lea.hbm %s7, %s614
          %s617 = sshll.u32 %s607, 4
          %s618 = int_to_ptr.vmem [resolvable:$true] %s617
          %620 = dma.vmem_to_hbm [thread:$0]  %s618, 128, %s615, %s604
        $region60: #{_adapter_apply.1} parent=47 // pred_fallthru
          _
      $region48: #{_adapter_apply.1} parent=5 // pred_fallthru
        _
      %p621 = scmp.le.s32.totalorder 2, %s18
      // Predicated region
      $region61: #{_adapter_apply.1} parent=5 // pred_check
        %p622 = pneg %p621
      $region62: #{_adapter_apply.1} parent=5 // pred_check_branch
        %624 = sbr.rel (%p622) target = $region64
      $region63: #{_adapter_apply.1} parent=5 // pred_region
        %s625 = ssub.s32 %s18, 2
        // Predicated region
        $region65: #{_adapter_apply.1} parent=63 // pred_check
          %p626 = pneg %p199
        $region66: #{_adapter_apply.1} parent=63 // pred_check_branch
          %628 = sbr.rel (%p626) target = $region68
        $region67: #{_adapter_apply.1} parent=63 // pred_region
          %s629 = sand.u32 %s184, 1
          %s630 = scalar_lea.sflag [#allocation4], %s629
          %s631 = sand.u32 %s184, 1
          %s632 = smul.addr %s631, 8
          %s633 = scalar_lea.vmem [#allocation7], %s632
          %634 = dma.done %s630, 128
        $region68: #{_adapter_apply.1} parent=63 // pred_fallthru
          _
      $region64: #{_adapter_apply.1} parent=5 // pred_fallthru
        _
    $region6: #{_adapter_apply.1} parent=1 // loop_footer
      %s22 = sadd.s32 1, %s18
    $region7: #{_adapter_apply.1} parent=1 // loop_footer_branch
      %17 = sbr.rel target = $region3
    $region8: #{_adapter_apply.1} parent=1 // loop_exit
      _
    %635 = vsyncpa [#allocation3], 1
    %s636 = scalar_lea.sflag [#allocation3], 1
    %637 = vsyncpa %s636, 1
    %638 = vsyncpa [#allocation6], 1
    %639 = vsyncpa [#allocation4], 1
    %s640 = scalar_lea.sflag [#allocation4], 1
    %641 = vsyncpa %s640, 1

// kernel: _adapter_apply.1
$region0: #{_adapter_apply.1}
  #allocation0 [shape = 'u32[]', space=smem, size = 0x4, offset = 0x4, fixed_abs, tag = 'smem constant byte address 0x4 - core index']
  #allocation1 [shape = 'u32[144,128]{1,0:T(1,128)}', space=vmem, size = 0x12000, scoped, tag = 'internal scratch']
  %s0 = inlined_call_operand.vmem [shape: f32[16,128], index: 0, kind: input, shape index: {}]
  %s1 = inlined_call_operand.hbm [shape: f32[128,256], index: 1, kind: input, shape index: {}]
  %s2 = inlined_call_operand.vmem [shape: f32[1,256], index: 2, kind: input, shape index: {}]
  %s3 = inlined_call_operand.vmem [shape: f32[1,256], index: 3, kind: input, shape index: {}]
  %s4 = inlined_call_operand.vmem [shape: f32[1,256], index: 4, kind: input, shape index: {}]
  %s5 = inlined_call_operand.hbm [shape: f32[256,128], index: 5, kind: input, shape index: {}]
  %s6 = inlined_call_operand.vmem [shape: f32[1,128], index: 6, kind: input, shape index: {}]
  %s7 = inlined_call_operand.hbm [shape: f32[16,128], index: 7, kind: output, shape index: {}]
  %s8 = sld [smem:[#allocation0]]
  $region69: #{_adapter_apply.1} parent=0
    _
  %s10 = ssub.s32 1, %s8
  %s11 = scalar_select 0, %s10, %s8
  $region1: #{_adapter_apply.1} parent=0
    #allocation2 [shape = 'u8[131072]{0}', space=vmem, size = 0x20000, scoped, tag = 'input window, operand 1, single buffered']
    #allocation3 [shape = 's32[2]{0}', space=sflag, size = 0x8, scoped, tag = 'scoped memory for _adapter_apply.1']
    #allocation4 [shape = 's32[2]{0}', space=sflag, size = 0x8, scoped, tag = 'scoped memory for _adapter_apply.1']
    #allocation5 [shape = 'u8[131072]{0}', space=vmem, size = 0x20000, scoped, tag = 'input window, operand 5, single buffered']
    #allocation6 [shape = 's32[1]{0}', space=sflag, size = 0x4, scoped, tag = 'scoped memory for _adapter_apply.1']
    #allocation7 [shape = 'u8[8192]{0}', space=vmem, size = 0x2000, scoped, tag = 'output window, operand 0']
    %12 = vsyncpa [#allocation3], 0
    %13 = vsyncpa [#allocation6], 0
    %14 = vsyncpa [#allocation4], 0
    %s15 = scalar_lea.sflag [#allocation4], 1
    %16 = vsyncpa %s15, 0
    loop: start=0, step=1, limit=4
    $region2: #{_adapter_apply.1} parent=1 // loop_pre_header
      _
    $region3: #{_adapter_apply.1} parent=1 // loop_header
      %s18 = sphi 0, %s22
      %p19 = scmp.ge.s32.totalorder %s18, 4
      %s28 = sphi 0, %s30
      %s31 = sphi 0, %s28
      %s32 = sphi 0, %s31
      %s48 = sphi 0, %s32
      %s52 = sphi 0, %s52
      %s54 = sphi 0, %s52
      %s55 = sphi 0, %s54
      %s69 = sphi 0, %s55
      %s73 = sphi 0, %s73
      %s75 = sphi 0, %s73
      %s76 = sphi 0, %s75
      %s90 = sphi 0, %s76
      %s94 = sphi 0, %s94
      %s96 = sphi 0, %s94
      %s97 = sphi 0, %s96
      %s111 = sphi 0, %s97
      %s115 = sphi 0, %s115
      %s117 = sphi 0, %s115
      %s118 = sphi 0, %s117
      %s132 = sphi 0, %s118
      %s136 = sphi 0, %s136
      %s138 = sphi 0, %s136
      %s139 = sphi 0, %s138
      %s153 = sphi 0, %s139
      %s157 = sphi 0, %s157
      %s159 = sphi 0, %s157
      %s160 = sphi 0, %s159
      %s174 = sphi 0, %s160
      %s180 = sphi 0, %s182
      %s183 = sphi 0, %s180
      %s184 = sphi 0, %s183
      %s200 = sphi 0, %s184
    $region4: #{_adapter_apply.1} parent=1 // loop_header_branch
      %21 = sbr.rel (%p19) target = $region8
    $region5: #{_adapter_apply.1} parent=1 // loop_body
      %s23 = ssub.s32 %s18, 1
      %s24 = ssub.s32 %s18, 2
      %s25 = sadd.s32 %s18, 1
      %s26 = ssub.s32 %s18, %s25
      %p27 = scmp.eq.s32.totalorder %s26, 0
      %s29 = sadd.s32 %s28, 1
      %s30 = scalar_select %p27, %s28, %s29
      %p33 = pneg %p27
      %p34 = scmp.eq.s32.totalorder %s18, 1
      %p35 = por %p33, %p34
      %p36 = scmp.ne.s32.totalorder %s28, %s31
      %p37 = scmp.eq.s32.totalorder %s18, 0
      %p38 = por %p36, %p37
      %p39 = scmp.ne.s32.totalorder %s28, %s31
      %p40 = scmp.eq.s32.totalorder %s23, 1
      %p41 = por %p39, %p40
      %p42 = scmp.ne.s32.totalorder %s31, %s32
      %p43 = scmp.eq.s32.totalorder %s23, 0
      %p44 = por %p42, %p43
      %p45 = scmp.ne.s32.totalorder %s31, %s32
      %p46 = scmp.eq.s32.totalorder %s24, 1
      %p47 = por %p45, %p46
      %p49 = scmp.ne.s32.totalorder %s32, %s48
      %p50 = scmp.eq.s32.totalorder %s24, 0
      %p51 = por %p49, %p50
      %s53 = sadd.s32 %s52, 1
      %p56 = scmp.eq.s32.totalorder %s18, 1
      %p57 = scmp.ne.s32.totalorder %s52, %s54
      %p58 = scmp.eq.s32.totalorder %s18, 0
      %p59 = por %p57, %p58
      %p60 = scmp.ne.s32.totalorder %s52, %s54
      %p61 = scmp.eq.s32.totalorder %s23, 1
      %p62 = por %p60, %p61
      %p63 = scmp.ne.s32.totalorder %s54, %s55
      %p64 = scmp.eq.s32.totalorder %s23, 0
      %p65 = por %p63, %p64
      %p66 = scmp.ne.s32.totalorder %s54, %s55
      %p67 = scmp.eq.s32.totalorder %s24, 1
      %p68 = por %p66, %p67
      %p70 = scmp.ne.s32.totalorder %s55, %s69
      %p71 = scmp.eq.s32.totalorder %s24, 0
      %p72 = por %p70, %p71
      %s74 = sadd.s32 %s73, 1
      %p77 = scmp.eq.s32.totalorder %s18, 1
      %p78 = scmp.ne.s32.totalorder %s73, %s75
      %p79 = scmp.eq.s32.totalorder %s18, 0
      %p80 = por %p78, %p79
      %p81 = scmp.ne.s32.totalorder %s73, %s75
      %p82 = scmp.eq.s32.totalorder %s23, 1
      %p83 = por %p81, %p82
      %p84 = scmp.ne.s32.totalorder %s75, %s76
      %p85 = scmp.eq.s32.totalorder %s23, 0
      %p86 = por %p84, %p85
      %p87 = scmp.ne.s32.totalorder %s75, %s76
      %p88 = scmp.eq.s32.totalorder %s24, 1
      %p89 = por %p87, %p88
      %p91 = scmp.ne.s32.totalorder %s76, %s90
      %p92 = scmp.eq.s32.totalorder %s24, 0
      %p93 = por %p91, %p92
      %s95 = sadd.s32 %s94, 1
      %p98 = scmp.eq.s32.totalorder %s18, 1
      %p99 = scmp.ne.s32.totalorder %s94, %s96
      %p100 = scmp.eq.s32.totalorder %s18, 0
      %p101 = por %p99, %p100
      %p102 = scmp.ne.s32.totalorder %s94, %s96
      %p103 = scmp.eq.s32.totalorder %s23, 1
      %p104 = por %p102, %p103
      %p105 = scmp.ne.s32.totalorder %s96, %s97
      %p106 = scmp.eq.s32.totalorder %s23, 0
      %p107 = por %p105, %p106
      %p108 = scmp.ne.s32.totalorder %s96, %s97
      %p109 = scmp.eq.s32.totalorder %s24, 1
      %p110 = por %p108, %p109
      %p112 = scmp.ne.s32.totalorder %s97, %s111
      %p113 = scmp.eq.s32.totalorder %s24, 0
      %p114 = por %p112, %p113
      %s116 = sadd.s32 %s115, 1
      %p119 = scmp.eq.s32.totalorder %s18, 1
      %p120 = scmp.ne.s32.totalorder %s115, %s117
      %p121 = scmp.eq.s32.totalorder %s18, 0
      %p122 = por %p120, %p121
      %p123 = scmp.ne.s32.totalorder %s115, %s117
      %p124 = scmp.eq.s32.totalorder %s23, 1
      %p125 = por %p123, %p124
      %p126 = scmp.ne.s32.totalorder %s117, %s118
      %p127 = scmp.eq.s32.totalorder %s23, 0
      %p128 = por %p126, %p127
      %p129 = scmp.ne.s32.totalorder %s117, %s118
      %p130 = scmp.eq.s32.totalorder %s24, 1
      %p131 = por %p129, %p130
      %p133 = scmp.ne.s32.totalorder %s118, %s132
      %p134 = scmp.eq.s32.totalorder %s24, 0
      %p135 = por %p133, %p134
      %s137 = sadd.s32 %s136, 1
      %p140 = scmp.eq.s32.totalorder %s18, 1
      %p141 = scmp.ne.s32.totalorder %s136, %s138
      %p142 = scmp.eq.s32.totalorder %s18, 0
      %p143 = por %p141, %p142
      %p144 = scmp.ne.s32.totalorder %s136, %s138
      %p145 = scmp.eq.s32.totalorder %s23, 1
      %p146 = por %p144, %p145
      %p147 = scmp.ne.s32.totalorder %s138, %s139
      %p148 = scmp.eq.s32.totalorder %s23, 0
      %p149 = por %p147, %p148
      %p150 = scmp.ne.s32.totalorder %s138, %s139
      %p151 = scmp.eq.s32.totalorder %s24, 1
      %p152 = por %p150, %p151
      %p154 = scmp.ne.s32.totalorder %s139, %s153
      %p155 = scmp.eq.s32.totalorder %s24, 0
      %p156 = por %p154, %p155
      %s158 = sadd.s32 %s157, 1
      %p161 = scmp.eq.s32.totalorder %s18, 1
      %p162 = scmp.ne.s32.totalorder %s157, %s159
      %p163 = scmp.eq.s32.totalorder %s18, 0
      %p164 = por %p162, %p163
      %p165 = scmp.ne.s32.totalorder %s157, %s159
      %p166 = scmp.eq.s32.totalorder %s23, 1
      %p167 = por %p165, %p166
      %p168 = scmp.ne.s32.totalorder %s159, %s160
      %p169 = scmp.eq.s32.totalorder %s23, 0
      %p170 = por %p168, %p169
      %p171 = scmp.ne.s32.totalorder %s159, %s160
      %p172 = scmp.eq.s32.totalorder %s24, 1
      %p173 = por %p171, %p172
      %p175 = scmp.ne.s32.totalorder %s160, %s174
      %p176 = scmp.eq.s32.totalorder %s24, 0
      %p177 = por %p175, %p176
      %s178 = ssub.s32 %s18, %s25
      %p179 = scmp.eq.s32.totalorder %s178, 0
      %s181 = sadd.s32 %s180, 1
      %s182 = scalar_select %p179, %s180, %s181
      %p185 = pneg %p179
      %p186 = scmp.eq.s32.totalorder %s18, 1
      %p187 = por %p185, %p186
      %p188 = scmp.ne.s32.totalorder %s180, %s183
      %p189 = scmp.eq.s32.totalorder %s18, 0
      %p190 = por %p188, %p189
      %p191 = scmp.ne.s32.totalorder %s180, %s183
      %p192 = scmp.eq.s32.totalorder %s23, 1
      %p193 = por %p191, %p192
      %p194 = scmp.ne.s32.totalorder %s183, %s184
      %p195 = scmp.eq.s32.totalorder %s23, 0
      %p196 = por %p194, %p195
      %p197 = scmp.ne.s32.totalorder %s183, %s184
      %p198 = scmp.eq.s32.totalorder %s24, 1
      %p199 = por %p197, %p198
      %p201 = scmp.ne.s32.totalorder %s184, %s200
      %p202 = scmp.eq.s32.totalorder %s24, 0
      %p203 = por %p201, %p202
      %p204 = scmp.le.s32.totalorder 1, %s18
      %p205 = scmp.lt.s32.totalorder %s18, 3
      %p206 = pnand %p204, %p205
      %p207 = pneg %p206
      // Predicated region
      $region9: #{_adapter_apply.1} parent=5 // pred_check
        _
      $region10: #{_adapter_apply.1} parent=5 // pred_check_branch
        %209 = sbr.rel (%p206) target = $region12
      $region11: #{_adapter_apply.1} parent=5 // pred_region
        %s210 = ssub.s32 %s18, 1
        // Predicated region
        $region13: #{_adapter_apply.1} parent=11 // pred_check
          %p211 = pneg %p65
        $region14: #{_adapter_apply.1} parent=11 // pred_check_branch
          %213 = sbr.rel (%p211) target = $region16
        $region15: #{_adapter_apply.1} parent=11 // pred_region
          %s215 = ssub.s32 4096, 4096
          %216 = vsyncadd [#allocation3], %s215
          %s217 = sshll.u32 [#allocation2], 4
          %s218 = int_to_ptr.vmem [resolvable:$true] %s217
          %223 = dma.hbm_to_vmem [thread:$0]  %s1, 4096, %s218, [#allocation3], 256, 256, 16
        $region16: #{_adapter_apply.1} parent=11 // pred_fallthru
          _
        // Predicated region
        $region17: #{_adapter_apply.1} parent=11 // pred_check
          %p224 = pneg %p86
        $region18: #{_adapter_apply.1} parent=11 // pred_check_branch
          %226 = sbr.rel (%p224) target = $region20
        $region19: #{_adapter_apply.1} parent=11 // pred_region
          _
        $region20: #{_adapter_apply.1} parent=11 // pred_fallthru
          _
        // Predicated region
        $region21: #{_adapter_apply.1} parent=11 // pred_check
          %p227 = pneg %p107
        $region22: #{_adapter_apply.1} parent=11 // pred_check_branch
          %229 = sbr.rel (%p227) target = $region24
        $region23: #{_adapter_apply.1} parent=11 // pred_region
          _
        $region24: #{_adapter_apply.1} parent=11 // pred_fallthru
          _
        // Predicated region
        $region25: #{_adapter_apply.1} parent=11 // pred_check
          %p230 = pneg %p128
        $region26: #{_adapter_apply.1} parent=11 // pred_check_branch
          %232 = sbr.rel (%p230) target = $region28
        $region27: #{_adapter_apply.1} parent=11 // pred_region
          _
        $region28: #{_adapter_apply.1} parent=11 // pred_fallthru
          _
        // Predicated region
        $region29: #{_adapter_apply.1} parent=11 // pred_check
          %p233 = pneg %p149
        $region30: #{_adapter_apply.1} parent=11 // pred_check_branch
          %235 = sbr.rel (%p233) target = $region32
        $region31: #{_adapter_apply.1} parent=11 // pred_region
          %s237 = ssub.s32 4096, 4096
          %238 = vsyncadd [#allocation6], %s237
          %s239 = sshll.u32 [#allocation5], 4
          %s240 = int_to_ptr.vmem [resolvable:$true] %s239
          %245 = dma.hbm_to_vmem [thread:$0]  %s5, 4096, %s240, [#allocation6], 128, 128, 8
        $region32: #{_adapter_apply.1} parent=11 // pred_fallthru
          _
        // Predicated region
        $region33: #{_adapter_apply.1} parent=11 // pred_check
          %p246 = pneg %p170
        $region34: #{_adapter_apply.1} parent=11 // pred_check_branch
          %248 = sbr.rel (%p246) target = $region36
        $region35: #{_adapter_apply.1} parent=11 // pred_region
          _
        $region36: #{_adapter_apply.1} parent=11 // pred_fallthru
          _
      $region12: #{_adapter_apply.1} parent=5 // pred_fallthru
        _
      %p249 = scmp.lt.s32.totalorder %s18, 2
      // Predicated region
      $region37: #{_adapter_apply.1} parent=5 // pred_check
        %p250 = pneg %p249
      $region38: #{_adapter_apply.1} parent=5 // pred_check_branch
        %252 = sbr.rel (%p250) target = $region40
      $region39: #{_adapter_apply.1} parent=5 // pred_region
        // Predicated region
        $region41: #{_adapter_apply.1} parent=39 // pred_check
          %p253 = pneg %p38
        $region42: #{_adapter_apply.1} parent=39 // pred_check_branch
          %255 = sbr.rel (%p253) target = $region44
        $region43: #{_adapter_apply.1} parent=39 // pred_region
          %p256 = scmp.lt.s32.totalorder %s18, 1
          %s257 = scalar_select %p256, %s18, 1
          %s258 = smul.addr %s257, 8
          %s259 = scalar_lea.vmem %s0, %s258
        $region44: #{_adapter_apply.1} parent=39 // pred_fallthru
          _
      $region40: #{_adapter_apply.1} parent=5 // pred_fallthru
        _
      %p260 = scmp.le.s32.totalorder 1, %s18
      %p261 = scmp.lt.s32.totalorder %s18, 3
      %p262 = pnand %p260, %p261
      %p263 = pneg %p262
      // Predicated region
      $region45: #{_adapter_apply.1} parent=5 // pred_check
        _
      $region46: #{_adapter_apply.1} parent=5 // pred_check_branch
        %265 = sbr.rel (%p262) target = $region48
      $region47: #{_adapter_apply.1} parent=5 // pred_region
        %s266 = ssub.s32 %s18, 1
        // Predicated region
        $region49: #{_adapter_apply.1} parent=47 // pred_check
          %p267 = pneg %p65
        $region50: #{_adapter_apply.1} parent=47 // pred_check_branch
          %269 = sbr.rel (%p267) target = $region52
        $region51: #{_adapter_apply.1} parent=47 // pred_region
          %270 = dma.done [#allocation3], 4096
        $region52: #{_adapter_apply.1} parent=47 // pred_fallthru
          _
        // Predicated region
        $region53: #{_adapter_apply.1} parent=47 // pred_check
          %p271 = pneg %p149
        $region54: #{_adapter_apply.1} parent=47 // pred_check_branch
          %273 = sbr.rel (%p271) target = $region56
        $region55: #{_adapter_apply.1} parent=47 // pred_region
          %274 = dma.done [#allocation6], 4096
        $region56: #{_adapter_apply.1} parent=47 // pred_fallthru
          _
        %p275 = scmp.lt.s32.totalorder %s23, 1
        %s276 = scalar_select %p275, %s23, 1
        %s277 = smul.addr %s276, 8
        %s278 = scalar_lea.vmem %s0, %s277
        %p279 = pneg %p44
        %p280 = pneg %p41
        %p281 = pneg %p65
        %p282 = pneg %p62
        %p283 = pneg %p86
        %p284 = pneg %p83
        %p285 = pneg %p107
        %p286 = pneg %p104
        %p287 = pneg %p128
        %p288 = pneg %p125
        %p289 = pneg %p149
        %p290 = pneg %p146
        %p291 = pneg %p170
        %p292 = pneg %p167
        %p293 = pneg %p196
        %p294 = pneg %p193
        %s295 = sand.u32 %s183, 1
        %s296 = scalar_lea.sflag [#allocation4], %s295
        %s297 = sand.u32 %s183, 1
        %s298 = smul.addr %s297, 8
        %s299 = scalar_lea.vmem [#allocation7], %s298
        %p300 = scmp.lt.s32.totalorder %s23, 1
        %s301 = scalar_select %p300, %s23, 1
        %s302 = smul.addr %s301, 8
        %s303 = scalar_lea.vmem %s0, %s302
        %v304 = vld [vmem:[%s2] sm:$0x3]
        %v305 = vld [vmem:[%s3] sm:$0x3]
        %v306 = vld [vmem:[%s4] sm:$0x3]
        %v307 = vld [vmem:[%s6] sm:$0x1]
        %v308 = vld [vmem:[%s303] sm:$0xff]
        %v309 = vld [vmem:[#allocation2] sm:$0xff]
        %v310 = vld [vmem:[#allocation2 + $0x8] sm:$0xff]
        %v311 = vld [vmem:[#allocation2 + $0x10] sm:$0xff]
        %v312 = vld [vmem:[#allocation2 + $0x18] sm:$0xff]
        %v313 = vld [vmem:[#allocation2 + $0x20] sm:$0xff]
        %v314 = vld [vmem:[#allocation2 + $0x28] sm:$0xff]
        %v315 = vld [vmem:[#allocation2 + $0x30] sm:$0xff]
        %v316 = vld [vmem:[#allocation2 + $0x38] sm:$0xff]
        %v317 = vld [vmem:[#allocation2 + $0x40] sm:$0xff]
        %v318 = vld [vmem:[#allocation2 + $0x48] sm:$0xff]
        %v319 = vld [vmem:[#allocation2 + $0x50] sm:$0xff]
        %v320 = vld [vmem:[#allocation2 + $0x58] sm:$0xff]
        %v321 = vld [vmem:[#allocation2 + $0x60] sm:$0xff]
        %v322 = vld [vmem:[#allocation2 + $0x68] sm:$0xff]
        %v323 = vld [vmem:[#allocation2 + $0x70] sm:$0xff]
        %v324 = vld [vmem:[#allocation2 + $0x78] sm:$0xff]
        %v325 = vld [vmem:[#allocation2 + $0x80] sm:$0xff]
        %v326 = vld [vmem:[#allocation2 + $0x88] sm:$0xff]
        %v327 = vld [vmem:[#allocation2 + $0x90] sm:$0xff]
        %v328 = vld [vmem:[#allocation2 + $0x98] sm:$0xff]
        %v329 = vld [vmem:[#allocation2 + $0xa0] sm:$0xff]
        %v330 = vld [vmem:[#allocation2 + $0xa8] sm:$0xff]
        %v331 = vld [vmem:[#allocation2 + $0xb0] sm:$0xff]
        %v332 = vld [vmem:[#allocation2 + $0xb8] sm:$0xff]
        %v333 = vld [vmem:[#allocation2 + $0xc0] sm:$0xff]
        %v334 = vld [vmem:[#allocation2 + $0xc8] sm:$0xff]
        %v335 = vld [vmem:[#allocation2 + $0xd0] sm:$0xff]
        %v336 = vld [vmem:[#allocation2 + $0xd8] sm:$0xff]
        %v337 = vld [vmem:[#allocation2 + $0xe0] sm:$0xff]
        %v338 = vld [vmem:[#allocation2 + $0xe8] sm:$0xff]
        %v339 = vld [vmem:[#allocation2 + $0xf0] sm:$0xff]
        %v340 = vld [vmem:[#allocation2 + $0xf8] sm:$0xff]
        %v342 = vlaneseq
        %v343 = vshrl.u32 %v342, 7
        %v344 = vsub.s32 0, %v343
        %v345 = vrot.slane %v304, %v344
        %v346 = vlaneseq
        %v347 = vshrl.u32 %v346, 7
        %v348 = vsub.s32 1, %v347
        %v349 = vrot.slane %v304, %v348
        %352 = vmatprep.subr.mxu0 %v310
        %353 = vmatpush1.msra.mxu0 %v309
        %354 = vmatprep.subr.mxu0 %v312
        %355 = vmatpush1.msra.mxu0 %v311
        %356 = vmatprep.subr.mxu0 %v314
        %357 = vmatpush1.msra.mxu0 %v313
        %358 = vmatprep.subr.mxu0 %v316
        %359 = vmatpush1.msra.mxu0 %v315
        %360 = vmatprep.subr.mxu0 %v318
        %361 = vmatpush1.msra.mxu0 %v317
        %362 = vmatprep.subr.mxu0 %v320
        %363 = vmatpush1.msra.mxu0 %v319
        %364 = vmatprep.subr.mxu0 %v322
        %365 = vmatpush1.msra.mxu0 %v321
        %366 = vmatprep.subr.mxu0 %v324
        %367 = vmatpush1.msra.mxu0 %v323
        %368 = vmatprep.subr.mxu0 %v326
        %369 = vmatpush1.msra.mxu0 %v325
        %370 = vmatprep.subr.mxu0 %v328
        %371 = vmatpush1.msra.mxu0 %v327
        %372 = vmatprep.subr.mxu0 %v330
        %373 = vmatpush1.msra.mxu0 %v329
        %374 = vmatprep.subr.mxu0 %v332
        %375 = vmatpush1.msra.mxu0 %v331
        %376 = vmatprep.subr.mxu0 %v334
        %377 = vmatpush1.msra.mxu0 %v333
        %378 = vmatprep.subr.mxu0 %v336
        %379 = vmatpush1.msra.mxu0 %v335
        %380 = vmatprep.subr.mxu0 %v338
        %381 = vmatpush1.msra.mxu0 %v337
        %382 = vmatprep.subr.mxu0 %v340
        %383 = vmatpush1.msra.mxu0 %v339
        %384 = vmatprep.subr.mxu0 0.0
        %385 = vmatpush1.msra.mxu0 0.0
        %386 = vmatprep.subr.mxu0 0.0
        %387 = vmatpush1.msra.mxu0 0.0
        %388 = vmatprep.subr.mxu0 0.0
        %389 = vmatpush1.msra.mxu0 0.0
        %390 = vmatprep.subr.mxu0 0.0
        %391 = vmatpush1.msra.mxu0 0.0
        %392 = vmatprep.subr.mxu0 0.0
        %393 = vmatpush1.msra.mxu0 0.0
        %394 = vmatprep.subr.mxu0 0.0
        %395 = vmatpush1.msra.mxu0 0.0
        %396 = vmatprep.subr.mxu0 0.0
        %397 = vmatpush1.msra.mxu0 0.0
        %398 = vmatprep.subr.mxu0 0.0
        %399 = vmatpush1.msra.mxu0 0.0
        %400 = vmatprep.subr.mxu0 0.0
        %401 = vmatpush1.msra.mxu0 0.0
        %402 = vmatprep.subr.mxu0 0.0
        %403 = vmatpush1.msra.mxu0 0.0
        %404 = vmatprep.subr.mxu0 0.0
        %405 = vmatpush1.msra.mxu0 0.0
        %406 = vmatprep.subr.mxu0 0.0
        %407 = vmatpush1.msra.mxu0 0.0
        %408 = vmatprep.subr.mxu0 0.0
        %409 = vmatpush1.msra.mxu0 0.0
        %410 = vmatprep.subr.mxu0 0.0
        %411 = vmatpush1.msra.mxu0 0.0
        %412 = vmatprep.subr.mxu0 0.0
        %413 = vmatpush1.msra.mxu0 0.0
        %414 = vmatprep.subr.mxu0 0.0
        %415 = vmatpush1.msra.mxu0 0.0
        %416 = vmatprep.mubr.f32.mxu0 0.0
        %417 = vmatmul.mubr.f32.gmra.mrb[0].mxu0 %v308
        %v418 = vpop.f32.mrb[0].mxu0
        %v419 = vadd.f32 %v345, %v418
        %v420 = vpop.f32.mrb[0].mxu0
        %v421 = vadd.f32 %v349, %v420
        %422 = vdwg.mxu0
        %v423 = vmul.f32 %v419, 1.702
        %v424 = vmul.f32 %v421, 1.702
        %v425 = vxor.u32 %v423, 2147483648
        %v426 = vxor.u32 %v424, 2147483648
        %v427 = vmul.f32 %v425, 1.442695
        %v428 = vpow.pop %v427
        %v429 = vmul.f32 %v426, 1.442695
        %v430 = vpow.pop %v429
        %v431 = vadd.f32 %v428, 1.0
        %v432 = vadd.f32 %v430, 1.0
        %v433 = vrcp.pop %v431
        %v434 = vmul.f32 1.0, %v433
        %v435 = vrcp.pop %v432
        %v436 = vmul.f32 1.0, %v435
        %v437 = vmul.f32 %v419, %v434
        %v438 = vmul.f32 %v421, %v436
        %v439 = vadd.f32 %v437, %v438
        %440 = vadd.xlane.f32.xlu0 %v439
        %v441 = vpop.xlane.xlu0 %440
        %v442 = vrcp.pop 256.0
        %v443 = vmul.f32 %v441, %v442
        %v444 = vmul.f32 %v437, %v437
        %v445 = vmul.f32 %v438, %v438
        %v446 = vadd.f32 %v444, %v445
        %447 = vadd.xlane.f32.xlu0 %v446
        %v448 = vpop.xlane.xlu0 %447
        %v449 = vmul.f32 %v448, %v442
        %v450 = vmul.f32 %v443, %v443
        %v451 = vsub.f32 %v449, %v450
        %v452 = vmax.f32 %v451, 0.0
        %v453 = vsub.f32 %v437, %v443
        %v454 = vsub.f32 %v438, %v443
        %v455 = vadd.f32 %v452, 1e-05
        %v456 = vrsqrt.pop %v455
        %v457 = vmul.f32 %v453, %v456
        %v458 = vmul.f32 %v454, %v456
        %v460 = vlaneseq
        %v461 = vshrl.u32 %v460, 7
        %v462 = vsub.s32 0, %v461
        %v463 = vrot.slane %v305, %v462
        %v464 = vlaneseq
        %v465 = vshrl.u32 %v464, 7
        %v466 = vsub.s32 1, %v465
        %v467 = vrot.slane %v305, %v466
        %v470 = vmul.f32 %v457, %v463
        %v471 = vmul.f32 %v458, %v467
        %v473 = vlaneseq
        %v474 = vshrl.u32 %v473, 7
        %v475 = vsub.s32 0, %v474
        %v476 = vrot.slane %v306, %v475
        %v477 = vlaneseq
        %v478 = vshrl.u32 %v477, 7
        %v479 = vsub.s32 1, %v478
        %v480 = vrot.slane %v306, %v479
        %v483 = vadd.f32 %v470, %v476
        %v484 = vadd.f32 %v471, %v480
        %v485 = vld [vmem:[#allocation5] sm:$0xff]
        %v486 = vld [vmem:[#allocation5 + $0x8] sm:$0xff]
        %v487 = vld [vmem:[#allocation5 + $0x10] sm:$0xff]
        %v488 = vld [vmem:[#allocation5 + $0x18] sm:$0xff]
        %v489 = vld [vmem:[#allocation5 + $0x20] sm:$0xff]
        %v490 = vld [vmem:[#allocation5 + $0x28] sm:$0xff]
        %v491 = vld [vmem:[#allocation5 + $0x30] sm:$0xff]
        %v492 = vld [vmem:[#allocation5 + $0x38] sm:$0xff]
        %v493 = vld [vmem:[#allocation5 + $0x40] sm:$0xff]
        %v494 = vld [vmem:[#allocation5 + $0x48] sm:$0xff]
        %v495 = vld [vmem:[#allocation5 + $0x50] sm:$0xff]
        %v496 = vld [vmem:[#allocation5 + $0x58] sm:$0xff]
        %v497 = vld [vmem:[#allocation5 + $0x60] sm:$0xff]
        %v498 = vld [vmem:[#allocation5 + $0x68] sm:$0xff]
        %v499 = vld [vmem:[#allocation5 + $0x70] sm:$0xff]
        %v500 = vld [vmem:[#allocation5 + $0x78] sm:$0xff]
        %v501 = vld [vmem:[#allocation5 + $0x80] sm:$0xff]
        %v502 = vld [vmem:[#allocation5 + $0x88] sm:$0xff]
        %v503 = vld [vmem:[#allocation5 + $0x90] sm:$0xff]
        %v504 = vld [vmem:[#allocation5 + $0x98] sm:$0xff]
        %v505 = vld [vmem:[#allocation5 + $0xa0] sm:$0xff]
        %v506 = vld [vmem:[#allocation5 + $0xa8] sm:$0xff]
        %v507 = vld [vmem:[#allocation5 + $0xb0] sm:$0xff]
        %v508 = vld [vmem:[#allocation5 + $0xb8] sm:$0xff]
        %v509 = vld [vmem:[#allocation5 + $0xc0] sm:$0xff]
        %v510 = vld [vmem:[#allocation5 + $0xc8] sm:$0xff]
        %v511 = vld [vmem:[#allocation5 + $0xd0] sm:$0xff]
        %v512 = vld [vmem:[#allocation5 + $0xd8] sm:$0xff]
        %v513 = vld [vmem:[#allocation5 + $0xe0] sm:$0xff]
        %v514 = vld [vmem:[#allocation5 + $0xe8] sm:$0xff]
        %v515 = vld [vmem:[#allocation5 + $0xf0] sm:$0xff]
        %v516 = vld [vmem:[#allocation5 + $0xf8] sm:$0xff]
        %v518 = vlaneseq
        %v519 = vshrl.u32 %v518, 7
        %v520 = vsub.s32 0, %v519
        %v521 = vrot.slane %v307, %v520
        %523 = vmatprep.subr.mxu0 0.0
        %524 = vmatpush1.msra.mxu0 %v485
        %525 = vmatprep.subr.mxu0 0.0
        %526 = vmatpush1.msra.mxu0 %v486
        %527 = vmatprep.subr.mxu0 0.0
        %528 = vmatpush1.msra.mxu0 %v487
        %529 = vmatprep.subr.mxu0 0.0
        %530 = vmatpush1.msra.mxu0 %v488
        %531 = vmatprep.subr.mxu0 0.0
        %532 = vmatpush1.msra.mxu0 %v489
        %533 = vmatprep.subr.mxu0 0.0
        %534 = vmatpush1.msra.mxu0 %v490
        %535 = vmatprep.subr.mxu0 0.0
        %536 = vmatpush1.msra.mxu0 %v491
        %537 = vmatprep.subr.mxu0 0.0
        %538 = vmatpush1.msra.mxu0 %v492
        %539 = vmatprep.subr.mxu0 0.0
        %540 = vmatpush1.msra.mxu0 %v493
        %541 = vmatprep.subr.mxu0 0.0
        %542 = vmatpush1.msra.mxu0 %v494
        %543 = vmatprep.subr.mxu0 0.0
        %544 = vmatpush1.msra.mxu0 %v495
        %545 = vmatprep.subr.mxu0 0.0
        %546 = vmatpush1.msra.mxu0 %v496
        %547 = vmatprep.subr.mxu0 0.0
        %548 = vmatpush1.msra.mxu0 %v497
        %549 = vmatprep.subr.mxu0 0.0
        %550 = vmatpush1.msra.mxu0 %v498
        %551 = vmatprep.subr.mxu0 0.0
        %552 = vmatpush1.msra.mxu0 %v499
        %553 = vmatprep.subr.mxu0 0.0
        %554 = vmatpush1.msra.mxu0 %v500
        %555 = vmatprep.subr.mxu0 0.0
        %556 = vmatpush1.msra.mxu0 %v501
        %557 = vmatprep.subr.mxu0 0.0
        %558 = vmatpush1.msra.mxu0 %v502
        %559 = vmatprep.subr.mxu0 0.0
        %560 = vmatpush1.msra.mxu0 %v503
        %561 = vmatprep.subr.mxu0 0.0
        %562 = vmatpush1.msra.mxu0 %v504
        %563 = vmatprep.subr.mxu0 0.0
        %564 = vmatpush1.msra.mxu0 %v505
        %565 = vmatprep.subr.mxu0 0.0
        %566 = vmatpush1.msra.mxu0 %v506
        %567 = vmatprep.subr.mxu0 0.0
        %568 = vmatpush1.msra.mxu0 %v507
        %569 = vmatprep.subr.mxu0 0.0
        %570 = vmatpush1.msra.mxu0 %v508
        %571 = vmatprep.subr.mxu0 0.0
        %572 = vmatpush1.msra.mxu0 %v509
        %573 = vmatprep.subr.mxu0 0.0
        %574 = vmatpush1.msra.mxu0 %v510
        %575 = vmatprep.subr.mxu0 0.0
        %576 = vmatpush1.msra.mxu0 %v511
        %577 = vmatprep.subr.mxu0 0.0
        %578 = vmatpush1.msra.mxu0 %v512
        %579 = vmatprep.subr.mxu0 0.0
        %580 = vmatpush1.msra.mxu0 %v513
        %581 = vmatprep.subr.mxu0 0.0
        %582 = vmatpush1.msra.mxu0 %v514
        %583 = vmatprep.subr.mxu0 0.0
        %584 = vmatpush1.msra.mxu0 %v515
        %585 = vmatprep.subr.mxu0 0.0
        %586 = vmatpush1.msra.mxu0 %v516
        %587 = vmatprep.mubr.f32.mxu0 %v484
        %588 = vmatmul.mubr.f32.gmra.mrb[0].mxu0 %v483
        %v589 = vpop.f32.mrb[0].mxu0
        %v590 = vadd.f32 %v521, %v589
        %v591 = vpop.f32.mrb[0].mxu0
        %592 = vdwg.mxu0
        %v593 = vmul.f32 %v590, 1.702
        %v594 = vxor.u32 %v593, 2147483648
        %v595 = vmul.f32 %v594, 1.442695
        %v596 = vpow.pop %v595
        %v597 = vadd.f32 %v596, 1.0
        %v598 = vrcp.pop %v597
        %v599 = vmul.f32 1.0, %v598
        %v600 = vmul.f32 %v590, %v599
        %v601 = vadd.f32 %v600, %v308
        %602 = vst [vmem:[%s299] sm:$0xff] %v601
        %s603 = sand.u32 %s183, 1
        %s604 = scalar_lea.sflag [#allocation4], %s603
        %s605 = sand.u32 %s183, 1
        %s606 = smul.addr %s605, 8
        %s607 = scalar_lea.vmem [#allocation7], %s606
        // Predicated region
        $region57: #{_adapter_apply.1} parent=47 // pred_check
          %p608 = pneg %p193
        $region58: #{_adapter_apply.1} parent=47 // pred_check_branch
          %610 = sbr.rel (%p608) target = $region60
        $region59: #{_adapter_apply.1} parent=47 // pred_region
          %s612 = ssub.s32 128, 128
          %613 = vsyncadd %s604, %s612
          %s614 = smul.addr %s23, 128
          %s615 = scalar_lea.hbm %s7, %s614
          %s617 = sshll.u32 %s607, 4
          %s618 = int_to_ptr.vmem [resolvable:$true] %s617
          %620 = dma.vmem_to_hbm [thread:$0]  %s618, 128, %s615, %s604
        $region60: #{_adapter_apply.1} parent=47 // pred_fallthru
          _
      $region48: #{_adapter_apply.1} parent=5 // pred_fallthru
        _
      %p621 = scmp.le.s32.totalorder 2, %s18
      // Predicated region
      $region61: #{_adapter_apply.1} parent=5 // pred_check
        %p622 = pneg %p621
      $region62: #{_adapter_apply.1} parent=5 // pred_check_branch
        %624 = sbr.rel (%p622) target = $region64
      $region63: #{_adapter_apply.1} parent=5 // pred_region
        %s625 = ssub.s32 %s18, 2
        // Predicated region
        $region65: #{_adapter_apply.1} parent=63 // pred_check
          %p626 = pneg %p199
        $region66: #{_adapter_apply.1} parent=63 // pred_check_branch
          %628 = sbr.rel (%p626) target = $region68
        $region67: #{_adapter_apply.1} parent=63 // pred_region
          %s629 = sand.u32 %s184, 1
          %s630 = scalar_lea.sflag [#allocation4], %s629
          %s631 = sand.u32 %s184, 1
          %s632 = smul.addr %s631, 8
          %s633 = scalar_lea.vmem [#allocation7], %s632
          %634 = dma.done %s630, 128
        $region68: #{_adapter_apply.1} parent=63 // pred_fallthru
          _
      $region64: #{_adapter_apply.1} parent=5 // pred_fallthru
        _
    $region6: #{_adapter_apply.1} parent=1 // loop_footer
      %s22 = sadd.s32 1, %s18
    $region7: #{_adapter_apply.1} parent=1 // loop_footer_branch
      %17 = sbr.rel target = $region3
    $region8: #{_adapter_apply.1} parent=1 // loop_exit
      _
    %635 = vsyncpa [#allocation3], 1
    %s636 = scalar_lea.sflag [#allocation3], 1
    %637 = vsyncpa %s636, 1
    %638 = vsyncpa [#allocation6], 1
    %639 = vsyncpa [#allocation4], 1
    %s640 = scalar_lea.sflag [#allocation4], 1
    %641 = vsyncpa %s640, 1

</llo_original>
